<compile_context>
chip_gen: v5e
topology: v5e:2x2
jax: 0.10.0
libtpu: 0.0.40
codegen_flags: <defaults>
</compile_context>

<pallas_src>
import functools

import jax
import jax.numpy as jnp
import numpy as np
from jax import lax
from jax.experimental import pallas as pl
from jax.experimental.pallas import tpu as pltpu

_LANE = 128                 # lane width -> output-channel padding unit
_HALO = 16                  # halo rows per side (bf16-sublane aligned)
_DILATIONS = (1, 2, 4)
_RFIELD = sum(_DILATIONS)   # wrap-contamination depth of the roll trick (= 7)
assert _HALO >= _RFIELD and _HALO % 16 == 0, \
    "halo must cover the dilated-conv chain's receptive field"


def _round_up(n, m):
    return ((n + m - 1) // m) * m


def _chip_generation():
    """Best-effort TPU generation from device_kind (5=v5e/v5p, 6=v6e, 7=v7x)."""
    try:
        kind = jax.devices()[0].device_kind.lower()
    except Exception:
        return 6
    if "v7" in kind or "7x" in kind:
        return 7
    if "v6" in kind:
        return 6
    if "v5" in kind:
        return 5
    if "v4" in kind:
        return 4
    return 6


def _vmem_budget_bytes(gen):
    try:
        cap = pltpu.get_tpu_info().vmem_capacity_bytes
    except Exception:
        cap = (64 if gen >= 7 else 128) * 1024 * 1024
    if gen >= 7:
        cap = min(cap, 64 * 1024 * 1024)   # v7x VMEM is 64 MiB per TensorCore
    return int(cap * 3 // 4)               # leave headroom (v7x ~48 MiB target)


def _pick_time_tile(size, c_in, hp, align, fuse_any, ew_bytes, out_bytes, budget):
    """Output rows per grid step (multiple of `align`), sized against `budget`."""
    # Constant (non-per-row) VMEM: weights + biases, double-buffered by Pallas.
    # TODO(synk): single-buffer the grid-invariant weight blocks
    # (pipeline_mode=pl.Buffered(1)) to reclaim the second copies; for now the
    # duplicate buffers are simply budgeted for here.
    w_bytes = 2 * 2 * (c_in * hp + 3 * c_in * hp + 2 * 3 * hp * hp) + 2 * 4 * 4 * hp
    avail = max(budget - w_bytes, 4 * 1024 * 1024)
    cat_w = 3 * hp if fuse_any else hp
    bytes_per_row = (
        2 * 2 * c_in            # bf16 input window, double-buffered
        + 2 * out_bytes * hp    # output tile, double-buffered
        + 2 * cat_w             # bf16 3-tap window fed to the MXU
        + 4 * hp                # f32 MXU accumulator
        + 2 * ew_bytes * hp     # working activation + leaky temporary
        + 4 * hp)               # residual f32 tile / slack
    rows = avail // bytes_per_row
    tq = max(align, min(_round_up(size, align), 2048, (rows // align) * align))
    assert tq % align == 0
    return tq


def _prep_conv_weight(w, kin_pad, cout_pad, fuse):
    """(3, Kin, Cout) tap-major conv weight -> lane-padded bf16.

    fuse=True  -> (3*kin_pad, cout_pad): one MXU dot on the lane-concat of
                  [h[t-d], h[t], h[t+d]] (tap 0 hits h[t-d]).
    fuse=False -> (3, kin_pad, cout_pad): three accumulating dots on shifts.
    """
    k, kin, cout = w.shape
    wp = jnp.zeros((k, kin_pad, cout_pad), jnp.float32).at[:, :kin, :cout].set(w)
    if fuse:
        wp = wp.reshape(k * kin_pad, cout_pad)
    return wp.astype(jnp.bfloat16)


def _dblock_kernel(xl_ref, xm_ref, xr_ref,
                   wr_ref, br_ref,
                   w1_ref, b1_ref, w2_ref, b2_ref, w3_ref, b3_ref,
                   o_ref, *, seq_len, fuse, ew_dtype):
    halo = xl_ref.shape[1]
    tq = xm_ref.shape[1]
    w_rows = tq + 2 * halo

    # Global (downsampled) row id of every window row, hoisted once; rows
    # outside [0, seq_len) are Conv1d's zero padding at every layer.
    t = pl.program_id(1)
    row = lax.broadcasted_iota(jnp.int32, (w_rows, 1), 0) + t * tq - halo
    valid = jnp.logical_and(row >= 0, row < seq_len)

    def leaky(v):                       # leaky_relu(0.2) in the working dtype
        return jnp.maximum(v, 0.2 * v)

    def conv(a16, w_ref, b_ref, d, fuse_this):
        # 'same' k=3 dilated conv on the halo'ed window. Window-edge rows
        # produced by the circular roll are garbage but stay within the halo
        # (contamination depth sum(dilations)=7 < _HALO=16) and never reach
        # the rows that are written out.
        prev = jnp.roll(a16, d, axis=0)       # h[t-d]
        nxt = jnp.roll(a16, -d, axis=0)       # h[t+d]
        if fuse_this:
            # one MXU dot, K = 3*lanes, bf16 concat (no f32 temporaries)
            cat = jnp.concatenate([prev, a16, nxt], axis=-1)
            out = jnp.dot(cat, w_ref[...], preferred_element_type=jnp.float32)
        else:
            # three accumulating dots: per-tap K already fills the MXU depth,
            # or the chip's MXU is only 128 deep -> fusion has no payoff.
            out = (jnp.dot(prev, w_ref[0], preferred_element_type=jnp.float32)
                   + jnp.dot(a16, w_ref[1], preferred_element_type=jnp.float32)
                   + jnp.dot(nxt, w_ref[2], preferred_element_type=jnp.float32))
        return out + b_ref[...]               # bias add on the f32 accumulator

    xm = xm_ref[0]                                              # (tq, C_in) bf16
    h = jnp.concatenate([xl_ref[0], xm, xr_ref[0]], axis=0).astype(ew_dtype)

    # Layers d=1, d=2: conv, then re-apply Conv1d's per-layer zero padding at
    # the true sequence ends (needed because the chain runs on a halo'ed
    # window). Activations are deliberately re-rounded to bf16 between layers
    # on bf16-VALU chips (precision tradeoff covered by the test tolerance).
    for w_ref, b_ref, d, f in ((w1_ref, b1_ref, 1, fuse[0]),
                               (w2_ref, b2_ref, 2, fuse[1])):
        a16 = leaky(h).astype(jnp.bfloat16)
        out = conv(a16, w_ref, b_ref, d, f)
        h = jnp.where(valid, out.astype(ew_dtype), 0.0)

    # Layer d=4: its out-of-sequence rows are sliced away by the caller, so no
    # mask is needed after it.
    a16 = leaky(h).astype(jnp.bfloat16)
    out3 = conv(a16, w3_ref, b3_ref, 4, fuse[2])

    # Residual 1x1 conv (commutes exactly with nearest-neighbour subsampling);
    # computed last so its (tq, hp) f32 tile is not live across the conv chain.
    res = jnp.dot(xm, wr_ref[...], preferred_element_type=jnp.float32) + br_ref[...]

    o_ref[0] = (out3[halo:halo + tq, :] + res).astype(o_ref.dtype)


def dblock_forward(x_nct, params, factor, out_dtype=jnp.bfloat16,
                   channels_last_output=False):
    """x_nct: (B, C_in, T) float32, PyTorch NCT layout.

    Returns (B, H, T//factor) (module semantics) or, with
    channels_last_output=True, (B, T//factor, H) to skip the final transpose.
    """
    B, C_in, T = x_nct.shape
    size = T // factor
    wr, br, w1, b1, w2, b2, w3, b3 = params
    H = wr.shape[-1]
    hp = _round_up(H, _LANE)            # lane-dense output channels (full vst)

    gen = _chip_generation()
    mxu_256 = gen >= 6                  # v6e/v7x: 256-deep MXU contraction
    ew_dtype = jnp.bfloat16 if gen >= 6 else jnp.float32   # v5e: no bf16 VALU
    # Fuse the 3 taps into one lane-concat matmul only where it actually raises
    # MXU contraction-depth utilisation (per-tap K == 128 on a 256-deep MXU).
    fuse = (mxu_256 and C_in == _LANE,
            mxu_256 and hp == _LANE,
            mxu_256 and hp == _LANE)

    # --- nearest-neighbour downsample (PyTorch F.interpolate default) --------
    if T % size == 0:                   # uniform stride -> cheap strided slice
        x_ds = x_nct[:, :, ::T // size]
    else:                               # non-uniform mapping -> gather
        idx = (jnp.arange(size) * T) // size
        x_ds = x_nct[:, :, idx]
    # TODO(synk): fold the downsample + NCT->NTC transpose into the kernel's
    # input path (strided pl.ds / scalar-prefetched indices) so XLA does not
    # make extra passes over the pre-downsample input.
    x_cl = jnp.transpose(x_ds, (0, 2, 1)).astype(jnp.bfloat16)  # (B, size, C_in)

    # --- halo-aware time tiling (input channels NOT padded in HBM) -----------
    budget = _vmem_budget_bytes(gen)
    tq = _pick_time_tile(size, C_in, hp, _HALO, any(fuse[1:]),
                         jnp.dtype(ew_dtype).itemsize,
                         jnp.dtype(out_dtype).itemsize, budget)
    nt = pl.cdiv(size, tq)
    assert tq % _HALO == 0
    tqh = tq // _HALO
    padded_len = (nt + 2) * tq          # one zero tile of slack on each side
    x_pad = jnp.zeros((B, padded_len, C_in), jnp.bfloat16)
    x_pad = x_pad.at[:, tq:tq + size, :].set(x_cl)

    # --- lane-padded parameters (bf16 weights, f32 biases) -------------------
    wr_p = jnp.zeros((C_in, hp), jnp.float32).at[:, :H].set(wr).astype(jnp.bfloat16)
    w1_p = _prep_conv_weight(w1, C_in, hp, fuse[0])
    w2_p = _prep_conv_weight(w2, hp, hp, fuse[1])
    w3_p = _prep_conv_weight(w3, hp, hp, fuse[2])
    pad_b = lambda b: jnp.zeros((1, hp), jnp.float32).at[:, :H].set(
        b.reshape(1, -1))

    def const_spec(*shape):
        return pl.BlockSpec(shape, lambda b, t: (0,) * len(shape))

    kernel = functools.partial(_dblock_kernel, seq_len=size, fuse=fuse,
                               ew_dtype=ew_dtype)

    out = pl.pallas_call(
        kernel,
        out_shape=jax.ShapeDtypeStruct((B, nt * tq, hp), out_dtype),
        grid=(B, nt),
        in_specs=[
            # overlapping halo'ed window = [left 16 | main tq | right 16]
            pl.BlockSpec((1, _HALO, C_in), lambda b, t: (b, (t + 1) * tqh - 1, 0)),
            pl.BlockSpec((1, tq, C_in), lambda b, t: (b, t + 1, 0)),
            pl.BlockSpec((1, _HALO, C_in), lambda b, t: (b, (t + 2) * tqh, 0)),
            const_spec(*wr_p.shape), const_spec(1, hp),     # residual 1x1
            const_spec(*w1_p.shape), const_spec(1, hp),     # conv d=1
            const_spec(*w2_p.shape), const_spec(1, hp),     # conv d=2
            const_spec(*w3_p.shape), const_spec(1, hp),     # conv d=4
        ],
        out_specs=pl.BlockSpec((1, tq, hp), lambda b, t: (b, t, 0)),
        compiler_params=pltpu.CompilerParams(
            dimension_semantics=("parallel", "parallel"),   # both TCs at B=1-2
            vmem_limit_bytes=budget),
    )(x_pad, x_pad, x_pad,
      wr_p, pad_b(br), w1_p, pad_b(b1), w2_p, pad_b(b2), w3_p, pad_b(b3))

    out = out[:, :size, :H]                     # drop time/channel padding
    if channels_last_output:
        return out
    return jnp.transpose(out, (0, 2, 1))        # back to (B, H, size)


def reference_forward(x_nct, params, factor):
    """Pure-JAX f32 reference that follows the PyTorch op order exactly."""
    wr, br, w1, b1, w2, b2, w3, b3 = params
    B, C_in, T = x_nct.shape
    size = T // factor
    idx = (jnp.arange(size) * T) // size

    # residual 1x1 conv on the full-length signal, then nearest downsample
    res = jnp.einsum('co,bct->bot', wr, x_nct) + br.reshape(1, -1, 1)
    res = res[:, :, idx]

    h = x_nct[:, :, idx]
    for (w, b, d) in ((w1, b1, 1), (w2, b2, 2), (w3, b3, 4)):
        h = jnp.where(h >= 0, h, 0.2 * h)
        hp = jnp.pad(h, ((0, 0), (0, 0), (d, d)))
        acc = 0.0
        for k in range(3):
            acc = acc + jnp.einsum('co,bct->bot', w[k],
                                   hp[:, :, k * d:k * d + size])
        h = acc + b.reshape(1, -1, 1)
    return h + res


def make_params(key, input_size, hidden_size):
    """Deterministic synthetic parameters.

    Weights stored tap-major, channels-in x channels-out:
      residual: (C_in, H);  conv_k: (3, C_in_or_H, H)
    The module zero-inits biases; small NONZERO biases are used here so the
    per-layer zero-padding / mask interaction at sequence ends is exercised.
    TODO(synk): module uses orthogonal weight init; plain Gaussian is used --
    only forward semantics (not the init distribution) matter for the kernel.
    """
    k0, k1, k2, k3, k4, k5, k6, k7 = jax.random.split(key, 8)
    s = 0.2
    wr = s * jax.random.normal(k0, (input_size, hidden_size), jnp.float32)
    w1 = s * jax.random.normal(k1, (3, input_size, hidden_size), jnp.float32)
    w2 = s * jax.random.normal(k2, (3, hidden_size, hidden_size), jnp.float32)
    w3 = s * jax.random.normal(k3, (3, hidden_size, hidden_size), jnp.float32)
    br = 0.1 * jax.random.normal(k4, (1, hidden_size), jnp.float32)
    b1 = 0.1 * jax.random.normal(k5, (1, hidden_size), jnp.float32)
    b2 = 0.1 * jax.random.normal(k6, (1, hidden_size), jnp.float32)
    b3 = 0.1 * jax.random.normal(k7, (1, hidden_size), jnp.float32)
    return (wr, br, w1, b1, w2, b2, w3, b3)


if __name__ == "__main__":
    B, C_in, T = 2, 4, 16
    hidden_size = 32
    factor = 2

    key = jax.random.PRNGKey(0)
    kx, kp = jax.random.split(key)
    x = jax.random.normal(kx, (B, C_in, T), jnp.float32)
    params = make_params(kp, C_in, hidden_size)

    fwd = jax.jit(functools.partial(dblock_forward, factor=factor))
    out = jax.block_until_ready(fwd(x, params))
    assert out.shape == (B, hidden_size, T // factor)

    # Reference in f32 on the same bf16-rounded inputs / weights the kernel
    # feeds the MXU; the tolerance additionally absorbs the deliberate bf16
    # re-rounding of intermediate activations and the bf16 output store.
    q = lambda a: a.astype(jnp.bfloat16).astype(jnp.float32)
    wr, br, w1, b1, w2, b2, w3, b3 = params
    ref = reference_forward(q(x), (q(wr), br, q(w1), b1, q(w2), b2, q(w3), b3),
                            factor)
    np.testing.assert_allclose(np.asarray(out, dtype=np.float32),
                               np.asarray(ref, dtype=np.float32),
                               rtol=5e-2, atol=5e-2)

    print("KERNEL_OK")
</pallas_src>

<mosaic_0001>
module attributes {stable_mosaic.version = 11 : i64} {
  func.func @_dblock_kernel(%arg0: i32, %arg1: i32, %arg2: memref<1x16x4xbf16, #tpu.memory_space<vmem>>, %arg3: memref<1x16x4xbf16, #tpu.memory_space<vmem>>, %arg4: memref<1x16x4xbf16, #tpu.memory_space<vmem>>, %arg5: memref<4x128xbf16, #tpu.memory_space<vmem>>, %arg6: memref<1x128xf32, #tpu.memory_space<vmem>>, %arg7: memref<3x4x128xbf16, #tpu.memory_space<vmem>>, %arg8: memref<1x128xf32, #tpu.memory_space<vmem>>, %arg9: memref<384x128xbf16, #tpu.memory_space<vmem>>, %arg10: memref<1x128xf32, #tpu.memory_space<vmem>>, %arg11: memref<384x128xbf16, #tpu.memory_space<vmem>>, %arg12: memref<1x128xf32, #tpu.memory_space<vmem>>, %arg13: memref<1x16x128xbf16, #tpu.memory_space<vmem>>) attributes {dimension_semantics = [#tpu.dimension_semantics<parallel>, #tpu.dimension_semantics<parallel>], iteration_bounds = array<i64: 2, 1>, scalar_prefetch = 0 : i64, scratch_operands = 0 : i64, tpu.core_type = #tpu.core_type<tc>, window_params = [{transform_indices = @transform_0, window_bounds = array<i64: 1, 16, 4>}, {transform_indices = @transform_1, window_bounds = array<i64: 1, 16, 4>}, {transform_indices = @transform_2, window_bounds = array<i64: 1, 16, 4>}, {pipeline_mode = #tpu.pipeline_mode<synchronous>, transform_indices = @transform_3, window_bounds = array<i64: 4, 128>}, {pipeline_mode = #tpu.pipeline_mode<synchronous>, transform_indices = @transform_4, window_bounds = array<i64: 1, 128>}, {pipeline_mode = #tpu.pipeline_mode<synchronous>, transform_indices = @transform_5, window_bounds = array<i64: 3, 4, 128>}, {pipeline_mode = #tpu.pipeline_mode<synchronous>, transform_indices = @transform_6, window_bounds = array<i64: 1, 128>}, {pipeline_mode = #tpu.pipeline_mode<synchronous>, transform_indices = @transform_7, window_bounds = array<i64: 384, 128>}, {pipeline_mode = #tpu.pipeline_mode<synchronous>, transform_indices = @transform_8, window_bounds = array<i64: 1, 128>}, {pipeline_mode = #tpu.pipeline_mode<synchronous>, transform_indices = @transform_9, window_bounds = array<i64: 384, 128>}, {pipeline_mode = #tpu.pipeline_mode<synchronous>, transform_indices = @transform_10, window_bounds = array<i64: 1, 128>}, {transform_indices = @transform_11, window_bounds = array<i64: 1, 16, 128>}]} {
    %0 = tpu.iota {dimensions = array<i32: 0>} : vector<48x1xi32>
    %c16_i32 = arith.constant 16 : i32
    %1 = arith.muli %arg1, %c16_i32 : i32
    %2 = vector.broadcast %1 : i32 to vector<48x1xi32>
    %3 = arith.addi %0, %2 : vector<48x1xi32>
    %c16_i32_0 = arith.constant 16 : i32
    %4 = vector.broadcast %c16_i32_0 : i32 to vector<48x1xi32>
    %5 = arith.subi %3, %4 : vector<48x1xi32>
    %c0_i32 = arith.constant 0 : i32
    %6 = vector.broadcast %c0_i32 : i32 to vector<48x1xi32>
    %7 = arith.cmpi sge, %5, %6 : vector<48x1xi32>
    %c8_i32 = arith.constant 8 : i32
    %8 = vector.broadcast %c8_i32 : i32 to vector<48x1xi32>
    %9 = arith.cmpi slt, %5, %8 : vector<48x1xi32>
    %10 = arith.andi %7, %9 : vector<48x1xi1>
    %c0 = arith.constant 0 : index
    %c0_1 = arith.constant 0 : index
    %c0_2 = arith.constant 0 : index
    %11 = vector.load %arg3[%c0, %c0_1, %c0_2] : memref<1x16x4xbf16, #tpu.memory_space<vmem>>, vector<1x16x4xbf16>
    %12 = vector.shape_cast %11 : vector<1x16x4xbf16> to vector<16x4xbf16>
    %c0_3 = arith.constant 0 : index
    %c0_4 = arith.constant 0 : index
    %c0_5 = arith.constant 0 : index
    %13 = vector.load %arg2[%c0_3, %c0_4, %c0_5] : memref<1x16x4xbf16, #tpu.memory_space<vmem>>, vector<1x16x4xbf16>
    %14 = vector.shape_cast %13 : vector<1x16x4xbf16> to vector<16x4xbf16>
    %c0_6 = arith.constant 0 : index
    %c0_7 = arith.constant 0 : index
    %c0_8 = arith.constant 0 : index
    %15 = vector.load %arg4[%c0_6, %c0_7, %c0_8] : memref<1x16x4xbf16, #tpu.memory_space<vmem>>, vector<1x16x4xbf16>
    %16 = vector.shape_cast %15 : vector<1x16x4xbf16> to vector<16x4xbf16>
    %17 = tpu.concatenate %14, %12, %16 in 0 : vector<16x4xbf16>, vector<16x4xbf16>, vector<16x4xbf16> -> vector<48x4xbf16>
    %cst = arith.constant 2.001950e-01 : bf16
    %18 = vector.broadcast %cst : bf16 to vector<48x4xbf16>
    %19 = arith.mulf %18, %17 : vector<48x4xbf16>
    %20 = arith.maximumf %17, %19 : vector<48x4xbf16>
    %21 = vector.extract_strided_slice %20 {offsets = [47, 0], sizes = [1, 4], strides = [1, 1]} : vector<48x4xbf16> to vector<1x4xbf16>
    %22 = vector.extract_strided_slice %20 {offsets = [0, 0], sizes = [47, 4], strides = [1, 1]} : vector<48x4xbf16> to vector<47x4xbf16>
    %23 = tpu.concatenate %21, %22 in 0 : vector<1x4xbf16>, vector<47x4xbf16> -> vector<48x4xbf16>
    %24 = vector.extract_strided_slice %20 {offsets = [1, 0], sizes = [47, 4], strides = [1, 1]} : vector<48x4xbf16> to vector<47x4xbf16>
    %25 = vector.extract_strided_slice %20 {offsets = [0, 0], sizes = [1, 4], strides = [1, 1]} : vector<48x4xbf16> to vector<1x4xbf16>
    %26 = tpu.concatenate %24, %25 in 0 : vector<47x4xbf16>, vector<1x4xbf16> -> vector<48x4xbf16>
    %c0_9 = arith.constant 0 : index
    %c0_10 = arith.constant 0 : index
    %c0_11 = arith.constant 0 : index
    %27 = vector.load %arg7[%c0_9, %c0_10, %c0_11] : memref<3x4x128xbf16, #tpu.memory_space<vmem>>, vector<1x4x128xbf16>
    %28 = vector.shape_cast %27 : vector<1x4x128xbf16> to vector<4x128xbf16>
    %cst_12 = arith.constant dense<0.000000e+00> : vector<48x128xf32>
    %29 = tpu.matmul %23, %28, %cst_12 {dimension_numbers = #tpu.dot_dimension_numbers<[1], [0], [0], [1], [0, 0, 1, 1], [], []>} : vector<48x4xbf16>, vector<4x128xbf16>, vector<48x128xf32> -> vector<48x128xf32>
    %c1 = arith.constant 1 : index
    %c0_13 = arith.constant 0 : index
    %c0_14 = arith.constant 0 : index
    %30 = vector.load %arg7[%c1, %c0_13, %c0_14] : memref<3x4x128xbf16, #tpu.memory_space<vmem>>, vector<1x4x128xbf16>
    %31 = vector.shape_cast %30 : vector<1x4x128xbf16> to vector<4x128xbf16>
    %cst_15 = arith.constant dense<0.000000e+00> : vector<48x128xf32>
    %32 = tpu.matmul %20, %31, %cst_15 {dimension_numbers = #tpu.dot_dimension_numbers<[1], [0], [0], [1], [0, 0, 1, 1], [], []>} : vector<48x4xbf16>, vector<4x128xbf16>, vector<48x128xf32> -> vector<48x128xf32>
    %33 = arith.addf %29, %32 : vector<48x128xf32>
    %c2 = arith.constant 2 : index
    %c0_16 = arith.constant 0 : index
    %c0_17 = arith.constant 0 : index
    %34 = vector.load %arg7[%c2, %c0_16, %c0_17] : memref<3x4x128xbf16, #tpu.memory_space<vmem>>, vector<1x4x128xbf16>
    %35 = vector.shape_cast %34 : vector<1x4x128xbf16> to vector<4x128xbf16>
    %cst_18 = arith.constant dense<0.000000e+00> : vector<48x128xf32>
    %36 = tpu.matmul %26, %35, %cst_18 {dimension_numbers = #tpu.dot_dimension_numbers<[1], [0], [0], [1], [0, 0, 1, 1], [], []>} : vector<48x4xbf16>, vector<4x128xbf16>, vector<48x128xf32> -> vector<48x128xf32>
    %37 = arith.addf %33, %36 : vector<48x128xf32>
    %c0_19 = arith.constant 0 : index
    %c0_20 = arith.constant 0 : index
    %38 = vector.load %arg8[%c0_19, %c0_20] : memref<1x128xf32, #tpu.memory_space<vmem>>, vector<1x128xf32>
    %39 = vector.broadcast %38 : vector<1x128xf32> to vector<48x128xf32>
    %40 = arith.addf %37, %39 : vector<48x128xf32>
    %41 = arith.truncf %40 : vector<48x128xf32> to vector<48x128xbf16>
    %cst_21 = arith.constant 0.000000e+00 : f32
    %42 = arith.truncf %cst_21 : f32 to bf16
    %43 = vector.shape_cast %10 : vector<48x1xi1> to vector<48x1xi1>
    %44 = vector.broadcast %43 : vector<48x1xi1> to vector<48x128xi1>
    %45 = vector.broadcast %42 : bf16 to vector<48x128xbf16>
    %46 = arith.select %44, %41, %45 : vector<48x128xi1>, vector<48x128xbf16>
    %cst_22 = arith.constant 2.001950e-01 : bf16
    %47 = vector.broadcast %cst_22 : bf16 to vector<48x128xbf16>
    %48 = arith.mulf %47, %46 : vector<48x128xbf16>
    %49 = arith.maximumf %46, %48 : vector<48x128xbf16>
    %50 = vector.extract_strided_slice %49 {offsets = [46, 0], sizes = [2, 128], strides = [1, 1]} : vector<48x128xbf16> to vector<2x128xbf16>
    %51 = vector.extract_strided_slice %49 {offsets = [0, 0], sizes = [46, 128], strides = [1, 1]} : vector<48x128xbf16> to vector<46x128xbf16>
    %52 = tpu.concatenate %50, %51 in 0 : vector<2x128xbf16>, vector<46x128xbf16> -> vector<48x128xbf16>
    %53 = vector.extract_strided_slice %49 {offsets = [2, 0], sizes = [46, 128], strides = [1, 1]} : vector<48x128xbf16> to vector<46x128xbf16>
    %54 = vector.extract_strided_slice %49 {offsets = [0, 0], sizes = [2, 128], strides = [1, 1]} : vector<48x128xbf16> to vector<2x128xbf16>
    %55 = tpu.concatenate %53, %54 in 0 : vector<46x128xbf16>, vector<2x128xbf16> -> vector<48x128xbf16>
    %56 = tpu.concatenate %52, %49, %55 in 1 : vector<48x128xbf16>, vector<48x128xbf16>, vector<48x128xbf16> -> vector<48x384xbf16>
    %c0_23 = arith.constant 0 : index
    %c0_24 = arith.constant 0 : index
    %57 = vector.load %arg9[%c0_23, %c0_24] : memref<384x128xbf16, #tpu.memory_space<vmem>>, vector<384x128xbf16>
    %cst_25 = arith.constant dense<0.000000e+00> : vector<48x128xf32>
    %58 = tpu.matmul %56, %57, %cst_25 {dimension_numbers = #tpu.dot_dimension_numbers<[1], [0], [0], [1], [0, 0, 1, 1], [], []>} : vector<48x384xbf16>, vector<384x128xbf16>, vector<48x128xf32> -> vector<48x128xf32>
    %c0_26 = arith.constant 0 : index
    %c0_27 = arith.constant 0 : index
    %59 = vector.load %arg10[%c0_26, %c0_27] : memref<1x128xf32, #tpu.memory_space<vmem>>, vector<1x128xf32>
    %60 = vector.broadcast %59 : vector<1x128xf32> to vector<48x128xf32>
    %61 = arith.addf %58, %60 : vector<48x128xf32>
    %62 = arith.truncf %61 : vector<48x128xf32> to vector<48x128xbf16>
    %cst_28 = arith.constant 0.000000e+00 : f32
    %63 = arith.truncf %cst_28 : f32 to bf16
    %64 = vector.shape_cast %10 : vector<48x1xi1> to vector<48x1xi1>
    %65 = vector.broadcast %64 : vector<48x1xi1> to vector<48x128xi1>
    %66 = vector.broadcast %63 : bf16 to vector<48x128xbf16>
    %67 = arith.select %65, %62, %66 : vector<48x128xi1>, vector<48x128xbf16>
    %cst_29 = arith.constant 2.001950e-01 : bf16
    %68 = vector.broadcast %cst_29 : bf16 to vector<48x128xbf16>
    %69 = arith.mulf %68, %67 : vector<48x128xbf16>
    %70 = arith.maximumf %67, %69 : vector<48x128xbf16>
    %71 = vector.extract_strided_slice %70 {offsets = [44, 0], sizes = [4, 128], strides = [1, 1]} : vector<48x128xbf16> to vector<4x128xbf16>
    %72 = vector.extract_strided_slice %70 {offsets = [0, 0], sizes = [44, 128], strides = [1, 1]} : vector<48x128xbf16> to vector<44x128xbf16>
    %73 = tpu.concatenate %71, %72 in 0 : vector<4x128xbf16>, vector<44x128xbf16> -> vector<48x128xbf16>
    %74 = vector.extract_strided_slice %70 {offsets = [4, 0], sizes = [44, 128], strides = [1, 1]} : vector<48x128xbf16> to vector<44x128xbf16>
    %75 = vector.extract_strided_slice %70 {offsets = [0, 0], sizes = [4, 128], strides = [1, 1]} : vector<48x128xbf16> to vector<4x128xbf16>
    %76 = tpu.concatenate %74, %75 in 0 : vector<44x128xbf16>, vector<4x128xbf16> -> vector<48x128xbf16>
    %77 = tpu.concatenate %73, %70, %76 in 1 : vector<48x128xbf16>, vector<48x128xbf16>, vector<48x128xbf16> -> vector<48x384xbf16>
    %c0_30 = arith.constant 0 : index
    %c0_31 = arith.constant 0 : index
    %78 = vector.load %arg11[%c0_30, %c0_31] : memref<384x128xbf16, #tpu.memory_space<vmem>>, vector<384x128xbf16>
    %cst_32 = arith.constant dense<0.000000e+00> : vector<48x128xf32>
    %79 = tpu.matmul %77, %78, %cst_32 {dimension_numbers = #tpu.dot_dimension_numbers<[1], [0], [0], [1], [0, 0, 1, 1], [], []>} : vector<48x384xbf16>, vector<384x128xbf16>, vector<48x128xf32> -> vector<48x128xf32>
    %c0_33 = arith.constant 0 : index
    %c0_34 = arith.constant 0 : index
    %80 = vector.load %arg12[%c0_33, %c0_34] : memref<1x128xf32, #tpu.memory_space<vmem>>, vector<1x128xf32>
    %81 = vector.broadcast %80 : vector<1x128xf32> to vector<48x128xf32>
    %82 = arith.addf %79, %81 : vector<48x128xf32>
    %c0_35 = arith.constant 0 : index
    %c0_36 = arith.constant 0 : index
    %83 = vector.load %arg5[%c0_35, %c0_36] : memref<4x128xbf16, #tpu.memory_space<vmem>>, vector<4x128xbf16>
    %cst_37 = arith.constant dense<0.000000e+00> : vector<16x128xf32>
    %84 = tpu.matmul %12, %83, %cst_37 {dimension_numbers = #tpu.dot_dimension_numbers<[1], [0], [0], [1], [0, 0, 1, 1], [], []>} : vector<16x4xbf16>, vector<4x128xbf16>, vector<16x128xf32> -> vector<16x128xf32>
    %c0_38 = arith.constant 0 : index
    %c0_39 = arith.constant 0 : index
    %85 = vector.load %arg6[%c0_38, %c0_39] : memref<1x128xf32, #tpu.memory_space<vmem>>, vector<1x128xf32>
    %86 = vector.broadcast %85 : vector<1x128xf32> to vector<16x128xf32>
    %87 = arith.addf %84, %86 : vector<16x128xf32>
    %88 = vector.extract_strided_slice %82 {offsets = [16, 0], sizes = [16, 128], strides = [1, 1]} : vector<48x128xf32> to vector<16x128xf32>
    %89 = arith.addf %88, %87 : vector<16x128xf32>
    %90 = arith.truncf %89 : vector<16x128xf32> to vector<16x128xbf16>
    %c0_40 = arith.constant 0 : index
    %c0_41 = arith.constant 0 : index
    %c0_42 = arith.constant 0 : index
    %91 = vector.load %arg13[%c0_40, %c0_41, %c0_42] : memref<1x16x128xbf16, #tpu.memory_space<vmem>>, vector<1x16x128xbf16>
    %92 = vector.shape_cast %91 : vector<1x16x128xbf16> to vector<16x128xbf16>
    %93 = vector.shape_cast %90 : vector<16x128xbf16> to vector<1x16x128xbf16>
    tpu.vector_store %arg13[%c0_40, %c0_41, %c0_42], %93 {strides = array<i32>} : memref<1x16x128xbf16, #tpu.memory_space<vmem>>, vector<1x16x128xbf16>,
    return
  }
  func.func @transform_0(%arg0: i32, %arg1: i32) -> (i32, i32, i32) {
    %c1_i32 = arith.constant 1 : i32
    %0 = arith.addi %arg1, %c1_i32 : i32
    %c1_i32_0 = arith.constant 1 : i32
    %1 = arith.muli %0, %c1_i32_0 : i32
    %c1_i32_1 = arith.constant 1 : i32
    %2 = arith.subi %1, %c1_i32_1 : i32
    %c0_i32 = arith.constant 0 : i32
    %c0_i32_2 = arith.constant 0 : i32
    return %arg0, %2, %c0_i32 : i32, i32, i32
  }
  func.func @transform_1(%arg0: i32, %arg1: i32) -> (i32, i32, i32) {
    %c1_i32 = arith.constant 1 : i32
    %0 = arith.addi %arg1, %c1_i32 : i32
    %c0_i32 = arith.constant 0 : i32
    %c0_i32_0 = arith.constant 0 : i32
    return %arg0, %0, %c0_i32 : i32, i32, i32
  }
  func.func @transform_2(%arg0: i32, %arg1: i32) -> (i32, i32, i32) {
    %c2_i32 = arith.constant 2 : i32
    %0 = arith.addi %arg1, %c2_i32 : i32
    %c1_i32 = arith.constant 1 : i32
    %1 = arith.muli %0, %c1_i32 : i32
    %c0_i32 = arith.constant 0 : i32
    %c0_i32_0 = arith.constant 0 : i32
    return %arg0, %1, %c0_i32 : i32, i32, i32
  }
  func.func @transform_3(%arg0: i32, %arg1: i32) -> (i32, i32) {
    %c0_i32 = arith.constant 0 : i32
    %c0_i32_0 = arith.constant 0 : i32
    %c0_i32_1 = arith.constant 0 : i32
    return %c0_i32, %c0_i32_0 : i32, i32
  }
  func.func @transform_4(%arg0: i32, %arg1: i32) -> (i32, i32) {
    %c0_i32 = arith.constant 0 : i32
    %c0_i32_0 = arith.constant 0 : i32
    %c0_i32_1 = arith.constant 0 : i32
    return %c0_i32, %c0_i32_0 : i32, i32
  }
  func.func @transform_5(%arg0: i32, %arg1: i32) -> (i32, i32, i32) {
    %c0_i32 = arith.constant 0 : i32
    %c0_i32_0 = arith.constant 0 : i32
    %c0_i32_1 = arith.constant 0 : i32
    %c0_i32_2 = arith.constant 0 : i32
    return %c0_i32, %c0_i32_0, %c0_i32_1 : i32, i32, i32
  }
  func.func @transform_6(%arg0: i32, %arg1: i32) -> (i32, i32) {
    %c0_i32 = arith.constant 0 : i32
    %c0_i32_0 = arith.constant 0 : i32
    %c0_i32_1 = arith.constant 0 : i32
    return %c0_i32, %c0_i32_0 : i32, i32
  }
  func.func @transform_7(%arg0: i32, %arg1: i32) -> (i32, i32) {
    %c0_i32 = arith.constant 0 : i32
    %c0_i32_0 = arith.constant 0 : i32
    %c0_i32_1 = arith.constant 0 : i32
    return %c0_i32, %c0_i32_0 : i32, i32
  }
  func.func @transform_8(%arg0: i32, %arg1: i32) -> (i32, i32) {
    %c0_i32 = arith.constant 0 : i32
    %c0_i32_0 = arith.constant 0 : i32
    %c0_i32_1 = arith.constant 0 : i32
    return %c0_i32, %c0_i32_0 : i32, i32
  }
  func.func @transform_9(%arg0: i32, %arg1: i32) -> (i32, i32) {
    %c0_i32 = arith.constant 0 : i32
    %c0_i32_0 = arith.constant 0 : i32
    %c0_i32_1 = arith.constant 0 : i32
    return %c0_i32, %c0_i32_0 : i32, i32
  }
  func.func @transform_10(%arg0: i32, %arg1: i32) -> (i32, i32) {
    %c0_i32 = arith.constant 0 : i32
    %c0_i32_0 = arith.constant 0 : i32
    %c0_i32_1 = arith.constant 0 : i32
    return %c0_i32, %c0_i32_0 : i32, i32
  }
  func.func @transform_11(%arg0: i32, %arg1: i32) -> (i32, i32, i32) {
    %c0_i32 = arith.constant 0 : i32
    %c0_i32_0 = arith.constant 0 : i32
    return %arg0, %arg1, %c0_i32 : i32, i32, i32
  }
}

</mosaic_0001>

<llo_original>
// kernel: dblock_forward.1
$region0: #{dblock_forward.1}
  #allocation0 [shape = 'u32[]', space=smem, size = 0x4, offset = 0x4, fixed_abs, tag = 'smem constant byte address 0x4 - core index']
  #allocation1 [shape = 'u32[72,128]{1,0:T(1,128)}', space=vmem, size = 0x9000, scoped, tag = 'internal scratch']
  %s0 = inlined_call_operand.vmem [shape: bf16[2,48,4], index: 0, kind: input, shape index: {}, may-alias: {0,1,2}]
  %s1 = inlined_call_operand.vmem [shape: bf16[2,48,4], index: 1, kind: input, shape index: {}, may-alias: {0,1,2}]
  %s2 = inlined_call_operand.vmem [shape: bf16[2,48,4], index: 2, kind: input, shape index: {}, may-alias: {0,1,2}]
  %s3 = inlined_call_operand.vmem [shape: bf16[4,128], index: 3, kind: input, shape index: {}]
  %s4 = inlined_call_operand.vmem [shape: f32[1,128], index: 4, kind: input, shape index: {}]
  %s5 = inlined_call_operand.vmem [shape: bf16[3,4,128], index: 5, kind: input, shape index: {}]
  %s6 = inlined_call_operand.vmem [shape: f32[1,128], index: 6, kind: input, shape index: {}]
  %s7 = inlined_call_operand.vmem [shape: bf16[384,128], index: 7, kind: input, shape index: {}]
  %s8 = inlined_call_operand.vmem [shape: f32[1,128], index: 8, kind: input, shape index: {}]
  %s9 = inlined_call_operand.vmem [shape: bf16[384,128], index: 9, kind: input, shape index: {}]
  %s10 = inlined_call_operand.vmem [shape: f32[1,128], index: 10, kind: input, shape index: {}]
  %s11 = inlined_call_operand.vmem [shape: bf16[2,16,128], index: 11, kind: output, shape index: {}]
  %s12 = sld [smem:[#allocation0]]
  $region77: #{dblock_forward.1} parent=0
    _
  %s14 = ssub.s32 1, %s12
  %s15 = scalar_select 0, %s14, %s12
  loop: start=0, step=1, limit=4
  $region2: #{dblock_forward.1} parent=0 // loop_pre_header
    _
  $region3: #{dblock_forward.1} parent=0 // loop_header
    %s17 = sphi 0, %s21
    %p18 = scmp.ge.s32.totalorder %s17, 4
    %s24 = sphi 0, %s36
    %s25 = sphi 0, %s32
    %s26 = sphi 0, %s24
    %s27 = sphi 0, %s25
    %s28 = sphi 0, %s26
    %s29 = sphi 0, %s27
    %s41 = sphi 0, %s43
    %s44 = sphi 0, %s41
    %s45 = sphi 0, %s44
    %s61 = sphi 0, %s45
    %s71 = sphi 0, %s73
    %s74 = sphi 0, %s71
    %s75 = sphi 0, %s74
    %s91 = sphi 0, %s75
    %s101 = sphi 0, %s103
    %s104 = sphi 0, %s101
    %s105 = sphi 0, %s104
    %s121 = sphi 0, %s105
    %s125 = sphi 0, %s125
    %s127 = sphi 0, %s125
    %s128 = sphi 0, %s127
    %s142 = sphi 0, %s128
    %s146 = sphi 0, %s146
    %s148 = sphi 0, %s146
    %s149 = sphi 0, %s148
    %s163 = sphi 0, %s149
    %s167 = sphi 0, %s167
    %s169 = sphi 0, %s167
    %s170 = sphi 0, %s169
    %s184 = sphi 0, %s170
    %s188 = sphi 0, %s188
    %s190 = sphi 0, %s188
    %s191 = sphi 0, %s190
    %s205 = sphi 0, %s191
    %s209 = sphi 0, %s209
    %s211 = sphi 0, %s209
    %s212 = sphi 0, %s211
    %s226 = sphi 0, %s212
    %s230 = sphi 0, %s230
    %s232 = sphi 0, %s230
    %s233 = sphi 0, %s232
    %s247 = sphi 0, %s233
    %s251 = sphi 0, %s251
    %s253 = sphi 0, %s251
    %s254 = sphi 0, %s253
    %s268 = sphi 0, %s254
    %s272 = sphi 0, %s272
    %s274 = sphi 0, %s272
    %s275 = sphi 0, %s274
    %s289 = sphi 0, %s275
    %s297 = sphi 0, %s299
    %s300 = sphi 0, %s297
    %s301 = sphi 0, %s300
    %s317 = sphi 0, %s301
  $region4: #{dblock_forward.1} parent=0 // loop_header_branch
    %20 = sbr.rel (%p18) target = $region8
  $region5: #{dblock_forward.1} parent=0 // loop_body
    %s22 = ssub.s32 %s17, 1
    %s23 = ssub.s32 %s17, 2
    %s30 = sadd.s32 1, %s25
    %p31 = scmp.ge.s32.totalorder %s30, 1
    %s32 = scalar_select %p31, 0, %s30
    %s33 = sadd.s32 1, %s24
    %s34 = scalar_select %p31, %s33, %s24
    %p35 = scmp.ge.s32.totalorder %s34, 2
    %s36 = scalar_select %p35, 0, %s34
    %s37 = ssub.s32 %s24, %s36
    %s38 = ssub.s32 %s25, %s32
    %s39 = sor.u32 %s37, %s38
    %p40 = scmp.eq.s32.totalorder %s39, 0
    %s42 = sadd.s32 %s41, 1
    %s43 = scalar_select %p40, %s41, %s42
    %p46 = pneg %p40
    %p47 = scmp.eq.s32.totalorder %s17, 1
    %p48 = por %p46, %p47
    %p49 = scmp.ne.s32.totalorder %s41, %s44
    %p50 = scmp.eq.s32.totalorder %s17, 0
    %p51 = por %p49, %p50
    %p52 = scmp.ne.s32.totalorder %s41, %s44
    %p53 = scmp.eq.s32.totalorder %s22, 1
    %p54 = por %p52, %p53
    %p55 = scmp.ne.s32.totalorder %s44, %s45
    %p56 = scmp.eq.s32.totalorder %s22, 0
    %p57 = por %p55, %p56
    %p58 = scmp.ne.s32.totalorder %s44, %s45
    %p59 = scmp.eq.s32.totalorder %s23, 1
    %p60 = por %p58, %p59
    %p62 = scmp.ne.s32.totalorder %s45, %s61
    %p63 = scmp.eq.s32.totalorder %s23, 0
    %p64 = por %p62, %p63
    %s65 = sadd.s32 %s25, 1
    %s66 = sadd.s32 %s32, 1
    %s67 = ssub.s32 %s24, %s36
    %s68 = ssub.s32 %s65, %s66
    %s69 = sor.u32 %s67, %s68
    %p70 = scmp.eq.s32.totalorder %s69, 0
    %s72 = sadd.s32 %s71, 1
    %s73 = scalar_select %p70, %s71, %s72
    %p76 = pneg %p70
    %p77 = scmp.eq.s32.totalorder %s17, 1
    %p78 = por %p76, %p77
    %p79 = scmp.ne.s32.totalorder %s71, %s74
    %p80 = scmp.eq.s32.totalorder %s17, 0
    %p81 = por %p79, %p80
    %p82 = scmp.ne.s32.totalorder %s71, %s74
    %p83 = scmp.eq.s32.totalorder %s22, 1
    %p84 = por %p82, %p83
    %p85 = scmp.ne.s32.totalorder %s74, %s75
    %p86 = scmp.eq.s32.totalorder %s22, 0
    %p87 = por %p85, %p86
    %p88 = scmp.ne.s32.totalorder %s74, %s75
    %p89 = scmp.eq.s32.totalorder %s23, 1
    %p90 = por %p88, %p89
    %p92 = scmp.ne.s32.totalorder %s75, %s91
    %p93 = scmp.eq.s32.totalorder %s23, 0
    %p94 = por %p92, %p93
    %s95 = sadd.s32 %s25, 2
    %s96 = sadd.s32 %s32, 2
    %s97 = ssub.s32 %s24, %s36
    %s98 = ssub.s32 %s95, %s96
    %s99 = sor.u32 %s97, %s98
    %p100 = scmp.eq.s32.totalorder %s99, 0
    %s102 = sadd.s32 %s101, 1
    %s103 = scalar_select %p100, %s101, %s102
    %p106 = pneg %p100
    %p107 = scmp.eq.s32.totalorder %s17, 1
    %p108 = por %p106, %p107
    %p109 = scmp.ne.s32.totalorder %s101, %s104
    %p110 = scmp.eq.s32.totalorder %s17, 0
    %p111 = por %p109, %p110
    %p112 = scmp.ne.s32.totalorder %s101, %s104
    %p113 = scmp.eq.s32.totalorder %s22, 1
    %p114 = por %p112, %p113
    %p115 = scmp.ne.s32.totalorder %s104, %s105
    %p116 = scmp.eq.s32.totalorder %s22, 0
    %p117 = por %p115, %p116
    %p118 = scmp.ne.s32.totalorder %s104, %s105
    %p119 = scmp.eq.s32.totalorder %s23, 1
    %p120 = por %p118, %p119
    %p122 = scmp.ne.s32.totalorder %s105, %s121
    %p123 = scmp.eq.s32.totalorder %s23, 0
    %p124 = por %p122, %p123
    %s126 = sadd.s32 %s125, 1
    %p129 = scmp.eq.s32.totalorder %s17, 1
    %p130 = scmp.ne.s32.totalorder %s125, %s127
    %p131 = scmp.eq.s32.totalorder %s17, 0
    %p132 = por %p130, %p131
    %p133 = scmp.ne.s32.totalorder %s125, %s127
    %p134 = scmp.eq.s32.totalorder %s22, 1
    %p135 = por %p133, %p134
    %p136 = scmp.ne.s32.totalorder %s127, %s128
    %p137 = scmp.eq.s32.totalorder %s22, 0
    %p138 = por %p136, %p137
    %p139 = scmp.ne.s32.totalorder %s127, %s128
    %p140 = scmp.eq.s32.totalorder %s23, 1
    %p141 = por %p139, %p140
    %p143 = scmp.ne.s32.totalorder %s128, %s142
    %p144 = scmp.eq.s32.totalorder %s23, 0
    %p145 = por %p143, %p144
    %s147 = sadd.s32 %s146, 1
    %p150 = scmp.eq.s32.totalorder %s17, 1
    %p151 = scmp.ne.s32.totalorder %s146, %s148
    %p152 = scmp.eq.s32.totalorder %s17, 0
    %p153 = por %p151, %p152
    %p154 = scmp.ne.s32.totalorder %s146, %s148
    %p155 = scmp.eq.s32.totalorder %s22, 1
    %p156 = por %p154, %p155
    %p157 = scmp.ne.s32.totalorder %s148, %s149
    %p158 = scmp.eq.s32.totalorder %s22, 0
    %p159 = por %p157, %p158
    %p160 = scmp.ne.s32.totalorder %s148, %s149
    %p161 = scmp.eq.s32.totalorder %s23, 1
    %p162 = por %p160, %p161
    %p164 = scmp.ne.s32.totalorder %s149, %s163
    %p165 = scmp.eq.s32.totalorder %s23, 0
    %p166 = por %p164, %p165
    %s168 = sadd.s32 %s167, 1
    %p171 = scmp.eq.s32.totalorder %s17, 1
    %p172 = scmp.ne.s32.totalorder %s167, %s169
    %p173 = scmp.eq.s32.totalorder %s17, 0
    %p174 = por %p172, %p173
    %p175 = scmp.ne.s32.totalorder %s167, %s169
    %p176 = scmp.eq.s32.totalorder %s22, 1
    %p177 = por %p175, %p176
    %p178 = scmp.ne.s32.totalorder %s169, %s170
    %p179 = scmp.eq.s32.totalorder %s22, 0
    %p180 = por %p178, %p179
    %p181 = scmp.ne.s32.totalorder %s169, %s170
    %p182 = scmp.eq.s32.totalorder %s23, 1
    %p183 = por %p181, %p182
    %p185 = scmp.ne.s32.totalorder %s170, %s184
    %p186 = scmp.eq.s32.totalorder %s23, 0
    %p187 = por %p185, %p186
    %s189 = sadd.s32 %s188, 1
    %p192 = scmp.eq.s32.totalorder %s17, 1
    %p193 = scmp.ne.s32.totalorder %s188, %s190
    %p194 = scmp.eq.s32.totalorder %s17, 0
    %p195 = por %p193, %p194
    %p196 = scmp.ne.s32.totalorder %s188, %s190
    %p197 = scmp.eq.s32.totalorder %s22, 1
    %p198 = por %p196, %p197
    %p199 = scmp.ne.s32.totalorder %s190, %s191
    %p200 = scmp.eq.s32.totalorder %s22, 0
    %p201 = por %p199, %p200
    %p202 = scmp.ne.s32.totalorder %s190, %s191
    %p203 = scmp.eq.s32.totalorder %s23, 1
    %p204 = por %p202, %p203
    %p206 = scmp.ne.s32.totalorder %s191, %s205
    %p207 = scmp.eq.s32.totalorder %s23, 0
    %p208 = por %p206, %p207
    %s210 = sadd.s32 %s209, 1
    %p213 = scmp.eq.s32.totalorder %s17, 1
    %p214 = scmp.ne.s32.totalorder %s209, %s211
    %p215 = scmp.eq.s32.totalorder %s17, 0
    %p216 = por %p214, %p215
    %p217 = scmp.ne.s32.totalorder %s209, %s211
    %p218 = scmp.eq.s32.totalorder %s22, 1
    %p219 = por %p217, %p218
    %p220 = scmp.ne.s32.totalorder %s211, %s212
    %p221 = scmp.eq.s32.totalorder %s22, 0
    %p222 = por %p220, %p221
    %p223 = scmp.ne.s32.totalorder %s211, %s212
    %p224 = scmp.eq.s32.totalorder %s23, 1
    %p225 = por %p223, %p224
    %p227 = scmp.ne.s32.totalorder %s212, %s226
    %p228 = scmp.eq.s32.totalorder %s23, 0
    %p229 = por %p227, %p228
    %s231 = sadd.s32 %s230, 1
    %p234 = scmp.eq.s32.totalorder %s17, 1
    %p235 = scmp.ne.s32.totalorder %s230, %s232
    %p236 = scmp.eq.s32.totalorder %s17, 0
    %p237 = por %p235, %p236
    %p238 = scmp.ne.s32.totalorder %s230, %s232
    %p239 = scmp.eq.s32.totalorder %s22, 1
    %p240 = por %p238, %p239
    %p241 = scmp.ne.s32.totalorder %s232, %s233
    %p242 = scmp.eq.s32.totalorder %s22, 0
    %p243 = por %p241, %p242
    %p244 = scmp.ne.s32.totalorder %s232, %s233
    %p245 = scmp.eq.s32.totalorder %s23, 1
    %p246 = por %p244, %p245
    %p248 = scmp.ne.s32.totalorder %s233, %s247
    %p249 = scmp.eq.s32.totalorder %s23, 0
    %p250 = por %p248, %p249
    %s252 = sadd.s32 %s251, 1
    %p255 = scmp.eq.s32.totalorder %s17, 1
    %p256 = scmp.ne.s32.totalorder %s251, %s253
    %p257 = scmp.eq.s32.totalorder %s17, 0
    %p258 = por %p256, %p257
    %p259 = scmp.ne.s32.totalorder %s251, %s253
    %p260 = scmp.eq.s32.totalorder %s22, 1
    %p261 = por %p259, %p260
    %p262 = scmp.ne.s32.totalorder %s253, %s254
    %p263 = scmp.eq.s32.totalorder %s22, 0
    %p264 = por %p262, %p263
    %p265 = scmp.ne.s32.totalorder %s253, %s254
    %p266 = scmp.eq.s32.totalorder %s23, 1
    %p267 = por %p265, %p266
    %p269 = scmp.ne.s32.totalorder %s254, %s268
    %p270 = scmp.eq.s32.totalorder %s23, 0
    %p271 = por %p269, %p270
    %s273 = sadd.s32 %s272, 1
    %p276 = scmp.eq.s32.totalorder %s17, 1
    %p277 = scmp.ne.s32.totalorder %s272, %s274
    %p278 = scmp.eq.s32.totalorder %s17, 0
    %p279 = por %p277, %p278
    %p280 = scmp.ne.s32.totalorder %s272, %s274
    %p281 = scmp.eq.s32.totalorder %s22, 1
    %p282 = por %p280, %p281
    %p283 = scmp.ne.s32.totalorder %s274, %s275
    %p284 = scmp.eq.s32.totalorder %s22, 0
    %p285 = por %p283, %p284
    %p286 = scmp.ne.s32.totalorder %s274, %s275
    %p287 = scmp.eq.s32.totalorder %s23, 1
    %p288 = por %p286, %p287
    %p290 = scmp.ne.s32.totalorder %s275, %s289
    %p291 = scmp.eq.s32.totalorder %s23, 0
    %p292 = por %p290, %p291
    %s293 = ssub.s32 %s24, %s36
    %s294 = ssub.s32 %s25, %s32
    %s295 = sor.u32 %s293, %s294
    %p296 = scmp.eq.s32.totalorder %s295, 0
    %s298 = sadd.s32 %s297, 1
    %s299 = scalar_select %p296, %s297, %s298
    %p302 = pneg %p296
    %p303 = scmp.eq.s32.totalorder %s17, 1
    %p304 = por %p302, %p303
    %p305 = scmp.ne.s32.totalorder %s297, %s300
    %p306 = scmp.eq.s32.totalorder %s17, 0
    %p307 = por %p305, %p306
    %p308 = scmp.ne.s32.totalorder %s297, %s300
    %p309 = scmp.eq.s32.totalorder %s22, 1
    %p310 = por %p308, %p309
    %p311 = scmp.ne.s32.totalorder %s300, %s301
    %p312 = scmp.eq.s32.totalorder %s22, 0
    %p313 = por %p311, %p312
    %p314 = scmp.ne.s32.totalorder %s300, %s301
    %p315 = scmp.eq.s32.totalorder %s23, 1
    %p316 = por %p314, %p315
    %p318 = scmp.ne.s32.totalorder %s301, %s317
    %p319 = scmp.eq.s32.totalorder %s23, 0
    %p320 = por %p318, %p319
    %p321 = scmp.le.s32.totalorder 1, %s17
    %p322 = scmp.lt.s32.totalorder %s17, 3
    %p323 = pnand %p321, %p322
    %p324 = pneg %p323
    // Predicated region
    $region9: #{dblock_forward.1} parent=5 // pred_check
      _
    $region10: #{dblock_forward.1} parent=5 // pred_check_branch
      %326 = sbr.rel (%p323) target = $region12
    $region11: #{dblock_forward.1} parent=5 // pred_region
      %s327 = ssub.s32 %s17, 1
      // Predicated region
      $region13: #{dblock_forward.1} parent=11 // pred_check
        %p328 = pneg %p138
      $region14: #{dblock_forward.1} parent=11 // pred_check_branch
        %330 = sbr.rel (%p328) target = $region16
      $region15: #{dblock_forward.1} parent=11 // pred_region
        _
      $region16: #{dblock_forward.1} parent=11 // pred_fallthru
        _
      // Predicated region
      $region17: #{dblock_forward.1} parent=11 // pred_check
        %p331 = pneg %p159
      $region18: #{dblock_forward.1} parent=11 // pred_check_branch
        %333 = sbr.rel (%p331) target = $region20
      $region19: #{dblock_forward.1} parent=11 // pred_region
        _
      $region20: #{dblock_forward.1} parent=11 // pred_fallthru
        _
      // Predicated region
      $region21: #{dblock_forward.1} parent=11 // pred_check
        %p334 = pneg %p180
      $region22: #{dblock_forward.1} parent=11 // pred_check_branch
        %336 = sbr.rel (%p334) target = $region24
      $region23: #{dblock_forward.1} parent=11 // pred_region
        _
      $region24: #{dblock_forward.1} parent=11 // pred_fallthru
        _
      // Predicated region
      $region25: #{dblock_forward.1} parent=11 // pred_check
        %p337 = pneg %p201
      $region26: #{dblock_forward.1} parent=11 // pred_check_branch
        %339 = sbr.rel (%p337) target = $region28
      $region27: #{dblock_forward.1} parent=11 // pred_region
        _
      $region28: #{dblock_forward.1} parent=11 // pred_fallthru
        _
      // Predicated region
      $region29: #{dblock_forward.1} parent=11 // pred_check
        %p340 = pneg %p222
      $region30: #{dblock_forward.1} parent=11 // pred_check_branch
        %342 = sbr.rel (%p340) target = $region32
      $region31: #{dblock_forward.1} parent=11 // pred_region
        _
      $region32: #{dblock_forward.1} parent=11 // pred_fallthru
        _
      // Predicated region
      $region33: #{dblock_forward.1} parent=11 // pred_check
        %p343 = pneg %p243
      $region34: #{dblock_forward.1} parent=11 // pred_check_branch
        %345 = sbr.rel (%p343) target = $region36
      $region35: #{dblock_forward.1} parent=11 // pred_region
        _
      $region36: #{dblock_forward.1} parent=11 // pred_fallthru
        _
      // Predicated region
      $region37: #{dblock_forward.1} parent=11 // pred_check
        %p346 = pneg %p264
      $region38: #{dblock_forward.1} parent=11 // pred_check_branch
        %348 = sbr.rel (%p346) target = $region40
      $region39: #{dblock_forward.1} parent=11 // pred_region
        _
      $region40: #{dblock_forward.1} parent=11 // pred_fallthru
        _
      // Predicated region
      $region41: #{dblock_forward.1} parent=11 // pred_check
        %p349 = pneg %p285
      $region42: #{dblock_forward.1} parent=11 // pred_check_branch
        %351 = sbr.rel (%p349) target = $region44
      $region43: #{dblock_forward.1} parent=11 // pred_region
        _
      $region44: #{dblock_forward.1} parent=11 // pred_fallthru
        _
    $region12: #{dblock_forward.1} parent=5 // pred_fallthru
      _
    %p352 = scmp.lt.s32.totalorder %s17, 2
    // Predicated region
    $region45: #{dblock_forward.1} parent=5 // pred_check
      %p353 = pneg %p352
    $region46: #{dblock_forward.1} parent=5 // pred_check_branch
      %355 = sbr.rel (%p353) target = $region48
    $region47: #{dblock_forward.1} parent=5 // pred_region
      // Predicated region
      $region49: #{dblock_forward.1} parent=47 // pred_check
        %p356 = pneg %p51
      $region50: #{dblock_forward.1} parent=47 // pred_check_branch
        %358 = sbr.rel (%p356) target = $region52
      $region51: #{dblock_forward.1} parent=47 // pred_region
        %s359 = smul.u32 2, %s25
        %p360 = scmp.lt.s32.totalorder %s24, 1
        %s361 = scalar_select %p360, %s24, 1
        %p362 = scmp.lt.s32.totalorder %s359, 5
        %s363 = scalar_select %p362, %s359, 5
        %s364 = smul.addr %s361, 6
        %s365 = sadd.s32 %s363, %s364
        %s366 = smul.addr %s365, 4
        %s367 = scalar_lea.vmem %s0, %s366
        %s368 = smul.u32 2, %s25
      $region52: #{dblock_forward.1} parent=47 // pred_fallthru
        _
      // Predicated region
      $region53: #{dblock_forward.1} parent=47 // pred_check
        %p369 = pneg %p81
      $region54: #{dblock_forward.1} parent=47 // pred_check_branch
        %371 = sbr.rel (%p369) target = $region56
      $region55: #{dblock_forward.1} parent=47 // pred_region
        %s372 = sadd.s32 %s25, 1
        %s373 = smul.u32 2, %s372
        %p374 = scmp.lt.s32.totalorder %s24, 1
        %s375 = scalar_select %p374, %s24, 1
        %p376 = scmp.lt.s32.totalorder %s373, 5
        %s377 = scalar_select %p376, %s373, 5
        %s378 = smul.addr %s375, 6
        %s379 = sadd.s32 %s377, %s378
        %s380 = smul.addr %s379, 4
        %s381 = scalar_lea.vmem %s1, %s380
        %s382 = sadd.s32 %s25, 1
        %s383 = smul.u32 2, %s382
      $region56: #{dblock_forward.1} parent=47 // pred_fallthru
        _
      // Predicated region
      $region57: #{dblock_forward.1} parent=47 // pred_check
        %p384 = pneg %p111
      $region58: #{dblock_forward.1} parent=47 // pred_check_branch
        %386 = sbr.rel (%p384) target = $region60
      $region59: #{dblock_forward.1} parent=47 // pred_region
        %s387 = sadd.s32 %s25, 2
        %s388 = smul.u32 2, %s387
        %p389 = scmp.lt.s32.totalorder %s24, 1
        %s390 = scalar_select %p389, %s24, 1
        %p391 = scmp.lt.s32.totalorder %s388, 5
        %s392 = scalar_select %p391, %s388, 5
        %s393 = smul.addr %s390, 6
        %s394 = sadd.s32 %s392, %s393
        %s395 = smul.addr %s394, 4
        %s396 = scalar_lea.vmem %s2, %s395
        %s397 = sadd.s32 %s25, 2
        %s398 = smul.u32 2, %s397
      $region60: #{dblock_forward.1} parent=47 // pred_fallthru
        _
    $region48: #{dblock_forward.1} parent=5 // pred_fallthru
      _
    %p399 = scmp.le.s32.totalorder 1, %s17
    %p400 = scmp.lt.s32.totalorder %s17, 3
    %p401 = pnand %p399, %p400
    %p402 = pneg %p401
    // Predicated region
    $region61: #{dblock_forward.1} parent=5 // pred_check
      _
    $region62: #{dblock_forward.1} parent=5 // pred_check_branch
      %404 = sbr.rel (%p401) target = $region64
    $region63: #{dblock_forward.1} parent=5 // pred_region
      %s405 = ssub.s32 %s17, 1
      %s406 = smul.u32 2, %s27
      %p407 = scmp.lt.s32.totalorder %s26, 1
      %s408 = scalar_select %p407, %s26, 1
      %p409 = scmp.lt.s32.totalorder %s406, 5
      %s410 = scalar_select %p409, %s406, 5
      %s411 = smul.addr %s408, 6
      %s412 = sadd.s32 %s410, %s411
      %s413 = smul.addr %s412, 4
      %s414 = scalar_lea.vmem %s0, %s413
      %p415 = pneg %p57
      %p416 = pneg %p54
      %s417 = sadd.s32 %s27, 1
      %s418 = smul.u32 2, %s417
      %p419 = scmp.lt.s32.totalorder %s26, 1
      %s420 = scalar_select %p419, %s26, 1
      %p421 = scmp.lt.s32.totalorder %s418, 5
      %s422 = scalar_select %p421, %s418, 5
      %s423 = smul.addr %s420, 6
      %s424 = sadd.s32 %s422, %s423
      %s425 = smul.addr %s424, 4
      %s426 = scalar_lea.vmem %s1, %s425
      %p427 = pneg %p87
      %p428 = pneg %p84
      %s429 = sadd.s32 %s27, 2
      %s430 = smul.u32 2, %s429
      %p431 = scmp.lt.s32.totalorder %s26, 1
      %s432 = scalar_select %p431, %s26, 1
      %p433 = scmp.lt.s32.totalorder %s430, 5
      %s434 = scalar_select %p433, %s430, 5
      %s435 = smul.addr %s432, 6
      %s436 = sadd.s32 %s434, %s435
      %s437 = smul.addr %s436, 4
      %s438 = scalar_lea.vmem %s2, %s437
      %p439 = pneg %p117
      %p440 = pneg %p114
      %p441 = pneg %p138
      %p442 = pneg %p135
      %p443 = pneg %p159
      %p444 = pneg %p156
      %p445 = pneg %p180
      %p446 = pneg %p177
      %p447 = pneg %p201
      %p448 = pneg %p198
      %p449 = pneg %p222
      %p450 = pneg %p219
      %p451 = pneg %p243
      %p452 = pneg %p240
      %p453 = pneg %p264
      %p454 = pneg %p261
      %p455 = pneg %p285
      %p456 = pneg %p282
      %p457 = pneg %p313
      %p458 = pneg %p310
      %s459 = smul.u32 2, %s27
      %p460 = scmp.lt.s32.totalorder %s26, 1
      %s461 = scalar_select %p460, %s26, 1
      %p462 = scmp.lt.s32.totalorder %s459, 1
      %s463 = scalar_select %p462, %s459, 1
      %s464 = smul.addr %s461, 2
      %s465 = sadd.s32 %s463, %s464
      %s466 = smul.addr %s465, 4
      %s467 = scalar_lea.vmem %s11, %s466
      %s468 = smul.u32 2, %s27
      %p469 = scmp.lt.s32.totalorder %s26, 1
      %s470 = scalar_select %p469, %s26, 1
      %p471 = scmp.lt.s32.totalorder %s468, 5
      %s472 = scalar_select %p471, %s468, 5
      %s473 = smul.addr %s470, 6
      %s474 = sadd.s32 %s472, %s473
      %s475 = smul.addr %s474, 4
      %s476 = scalar_lea.vmem %s0, %s475
      %s477 = smul.u32 2, %s27
      %s478 = sadd.s32 %s27, 1
      %s479 = smul.u32 2, %s478
      %p480 = scmp.lt.s32.totalorder %s26, 1
      %s481 = scalar_select %p480, %s26, 1
      %p482 = scmp.lt.s32.totalorder %s479, 5
      %s483 = scalar_select %p482, %s479, 5
      %s484 = smul.addr %s481, 6
      %s485 = sadd.s32 %s483, %s484
      %s486 = smul.addr %s485, 4
      %s487 = scalar_lea.vmem %s1, %s486
      %s488 = sadd.s32 %s27, 1
      %s489 = smul.u32 2, %s488
      %s490 = sadd.s32 %s27, 2
      %s491 = smul.u32 2, %s490
      %p492 = scmp.lt.s32.totalorder %s26, 1
      %s493 = scalar_select %p492, %s26, 1
      %p494 = scmp.lt.s32.totalorder %s491, 5
      %s495 = scalar_select %p494, %s491, 5
      %s496 = smul.addr %s493, 6
      %s497 = sadd.s32 %s495, %s496
      %s498 = smul.addr %s497, 4
      %s499 = scalar_lea.vmem %s2, %s498
      %s500 = sadd.s32 %s27, 2
      %s501 = smul.u32 2, %s500
      %s502 = smul.u32 2, %s27
      %p503 = scmp.lt.s32.totalorder %s26, 1
      %s504 = scalar_select %p503, %s26, 1
      %p505 = scmp.lt.s32.totalorder %s502, 1
      %s506 = scalar_select %p505, %s502, 1
      %s507 = smul.addr %s504, 2
      %s508 = sadd.s32 %s506, %s507
      %s509 = smul.addr %s508, 4
      %s510 = scalar_lea.vmem %s11, %s509
      %s511 = smul.u32 2, %s27
      %v513 = vlaneseq
      %v514 = vshrl.u32 %v513, 7
      %v515 = vadd.s32 %v514, 8
      %v516 = vadd.s32 %v514, 16
      %v517 = vadd.s32 %v514, 24
      %v518 = vadd.s32 %v514, 32
      %v519 = vadd.s32 %v514, 40
      %s520 = smul.u32 %s27, 16
      %v521 = vstv %s520
      %v522 = vadd.s32 %v514, %v521
      %v523 = vadd.s32 %v515, %v521
      %v524 = vadd.s32 %v516, %v521
      %v525 = vadd.s32 %v517, %v521
      %v526 = vadd.s32 %v518, %v521
      %v527 = vadd.s32 %v519, %v521
      %v528 = vsub.s32 %v522, 16
      %v529 = vsub.s32 %v523, 16
      %v530 = vsub.s32 %v524, 16
      %v531 = vsub.s32 %v525, 16
      %v532 = vsub.s32 %v526, 16
      %v533 = vsub.s32 %v527, 16
      %vm534 = vcmp.ge.s32.totalorder %v528, 0
      %vm535 = vcmp.ge.s32.totalorder %v529, 0
      %vm536 = vcmp.ge.s32.totalorder %v530, 0
      %vm537 = vcmp.ge.s32.totalorder %v531, 0
      %vm538 = vcmp.ge.s32.totalorder %v532, 0
      %vm539 = vcmp.ge.s32.totalorder %v533, 0
      %vm540 = vcmp.lt.s32.totalorder %v528, 8
      %vm541 = vcmp.lt.s32.totalorder %v529, 8
      %vm542 = vcmp.lt.s32.totalorder %v530, 8
      %vm543 = vcmp.lt.s32.totalorder %v531, 8
      %vm544 = vcmp.lt.s32.totalorder %v532, 8
      %vm545 = vcmp.lt.s32.totalorder %v533, 8
      %vm546 = vmand %vm534, %vm540
      %vm547 = vmand %vm535, %vm541
      %vm548 = vmand %vm536, %vm542
      %vm549 = vmand %vm537, %vm543
      %vm550 = vmand %vm538, %vm544
      %vm551 = vmand %vm539, %vm545
      %v552 = vld [vmem:[%s487] sm:$0xf]
      %v553 = vld [vmem:[%s487 + $0x4] sm:$0xf]
      %v554 = vld [vmem:[%s476] sm:$0xf]
      %v555 = vld [vmem:[%s476 + $0x4] sm:$0xf]
      %v556 = vld [vmem:[%s499] sm:$0xf]
      %v557 = vld [vmem:[%s499 + $0x4] sm:$0xf]
      %v560 = vunpack.c.l.b16 %v554
      %v561 = vunpack.c.l.b16 %v555
      %v562 = vpack.c.b16 %v561, %v560
      %v566 = vunpack.c.l.b16 %v552
      %v567 = vunpack.c.l.b16 %v553
      %v568 = vpack.c.b16 %v567, %v566
      %v572 = vunpack.c.l.b16 %v556
      %v573 = vunpack.c.l.b16 %v557
      %v574 = vpack.c.b16 %v573, %v572
      %v576 = vunpack.c.l.bf16 %v562
      %v577 = vunpack.c.h.bf16 %v562
      %v578 = vunpack.c.l.bf16 %v568
      %v579 = vunpack.c.h.bf16 %v568
      %v580 = vunpack.c.l.bf16 %v574
      %v581 = vunpack.c.h.bf16 %v574
      %v582 = vmul.f32 %v576, 0.20019531
      %v583 = vmul.f32 %v577, 0.20019531
      %v584 = vmul.f32 %v578, 0.20019531
      %v585 = vmul.f32 %v579, 0.20019531
      %v586 = vmul.f32 %v580, 0.20019531
      %v587 = vmul.f32 %v581, 0.20019531
      %v588 = vpack.c.bf16 %v582, %v582
      %v589 = vpack.c.bf16 %v583, %v583
      %v590 = vpack.c.bf16 %v584, %v584
      %v591 = vpack.c.bf16 %v585, %v585
      %v592 = vpack.c.bf16 %v586, %v586
      %v593 = vpack.c.bf16 %v587, %v587
      %v594 = vunpack.c.l.bf16 %v588
      %v595 = vunpack.c.l.bf16 %v589
      %v596 = vunpack.c.l.bf16 %v590
      %v597 = vunpack.c.l.bf16 %v591
      %v598 = vunpack.c.l.bf16 %v592
      %v599 = vunpack.c.l.bf16 %v593
      %v600 = vmax.f32 %v576, %v594
      %v601 = vmax.f32 %v577, %v595
      %v602 = vmax.f32 %v578, %v596
      %v603 = vmax.f32 %v579, %v597
      %v604 = vmax.f32 %v580, %v598
      %v605 = vmax.f32 %v581, %v599
      %v606 = vpack.c.bf16 %v600, %v600
      %v607 = vpack.c.bf16 %v601, %v601
      %v608 = vpack.c.bf16 %v602, %v602
      %v609 = vpack.c.bf16 %v603, %v603
      %v610 = vpack.c.bf16 %v604, %v604
      %v611 = vpack.c.bf16 %v605, %v605
      %v613 = vunpack.c.l.b16 %v611
      %v614 = vpack.c.b16 %v613, %v613
      %v616 = vshrl.u32 %v614, 16
      %v618 = vrot.slane %v616, 3
      %v625 = vunpack.c.l.b16 %v606
      %v626 = vunpack.c.l.b16 %v607
      %v627 = vunpack.c.l.b16 %v608
      %v628 = vunpack.c.l.b16 %v609
      %v629 = vunpack.c.l.b16 %v610
      %v630 = vpack.c.b16 %v626, %v625
      %v631 = vpack.c.b16 %v628, %v627
      %v632 = vpack.c.b16 %v613, %v629
      %vm633 = vsmask.f32 256
      %v635 = vshrl.u32 %v630, 16
      %v637 = vrot.slane %v635, 7
      %v638 = vshll.u32 %v630, 16
      %v640 = vor.u32 %v637, %v638
      %v642 = vshrl.u32 %v631, 16
      %v644 = vrot.slane %v642, 7
      %v645 = vshll.u32 %v631, 16
      %v647 = vor.u32 %v644, %v645
      %v648 = vsel %vm633, %v637, %v647
      %v650 = vshrl.u32 %v632, 16
      %v652 = vrot.slane %v650, 7
      %v653 = vshll.u32 %v632, 16
      %v655 = vor.u32 %v652, %v653
      %v656 = vsel %vm633, %v644, %v655
      %vm658 = vcmask 1040384
      %vm659 = vmand %vm658, %vm633
      %v660 = vsel %vm659, %v618, %v640
      %vm661 = vsmask.f32 7424
      %v662 = vrot.slane %v638, 1
      %v663 = vor.u32 %v635, %v662
      %v664 = vrot.slane %v645, 1
      %v665 = vsel %vm661, %v663, %v664
      %v666 = vor.u32 %v642, %v664
      %v667 = vrot.slane %v653, 1
      %v668 = vsel %vm661, %v666, %v667
      %v669 = vor.u32 %v650, %v667
      %v671 = vpack.c.b16 %v625, %v625
      %v673 = vshll.u32 %v671, 16
      %v675 = vrot.slane %v673, 1
      %vm677 = vcmask 1047552
      %vm678 = vmand %vm677, %vm661
      %v679 = vsel %vm678, %v669, %v675
      %v680 = vld [vmem:[%s5] sm:$0x3]
      %s681 = scalar_lea.vmem %s5, 2
      %v682 = vld [vmem:[%s681] sm:$0x3]
      %vm683 = vcmask 31744
      %v684 = vsel %vm683, %v630, 0
      %v686 = vsel %vm683, %v631, 0
      %v688 = vsel %vm683, %v632, 0
      %vm690 = vcmask 1041408
      %v692 = vsel %vm690, %v682, 0
      %694 = vmatpush.bf16.msra.mxu0 0
      %695 = vmatpush.bf16.msra.mxu0 0
      %696 = vmatpush.bf16.msra.mxu0 0
      %697 = vmatpush.bf16.msra.mxu0 0
      %698 = vmatpush.bf16.msra.mxu0 0
      %699 = vmatpush.bf16.msra.mxu0 0
      %700 = vmatpush.bf16.msra.mxu0 0
      %701 = vmatpush.bf16.msra.mxu0 %v692
      %702 = vmatmul.bf16.gmra.mxu0 %v684
      %v703 = vpop.f32.mrf.mxu0
      %v704 = vadd.f32 0.0, %v703
      %v705 = vpop.f32.mrf.mxu0
      %v706 = vadd.f32 0.0, %v705
      %707 = vmatmul.bf16.gmra.mxu0 %v686
      %v708 = vpop.f32.mrf.mxu0
      %v709 = vadd.f32 0.0, %v708
      %v710 = vpop.f32.mrf.mxu0
      %v711 = vadd.f32 0.0, %v710
      %712 = vmatmul.bf16.gmra.mxu0 %v688
      %v713 = vpop.f32.mrf.mxu0
      %v714 = vadd.f32 0.0, %v713
      %v715 = vpop.f32.mrf.mxu0
      %v716 = vadd.f32 0.0, %v715
      %717 = vdwg.mxu0
      %v719 = vsel %vm683, %v660, 0
      %v722 = vsel %vm683, %v648, 0
      %v725 = vsel %vm683, %v656, 0
      %v728 = vsel %vm690, %v680, 0
      %730 = vmatpush.bf16.msra.mxu0 0
      %731 = vmatpush.bf16.msra.mxu0 0
      %732 = vmatpush.bf16.msra.mxu0 0
      %733 = vmatpush.bf16.msra.mxu0 0
      %734 = vmatpush.bf16.msra.mxu0 0
      %735 = vmatpush.bf16.msra.mxu0 0
      %736 = vmatpush.bf16.msra.mxu0 0
      %737 = vmatpush.bf16.msra.mxu0 %v728
      %738 = vmatmul.bf16.gmra.mxu0 %v719
      %v739 = vpop.f32.mrf.mxu0
      %v740 = vadd.f32 %v704, %v739
      %v741 = vpop.f32.mrf.mxu0
      %v742 = vadd.f32 %v706, %v741
      %743 = vmatmul.bf16.gmra.mxu0 %v722
      %v744 = vpop.f32.mrf.mxu0
      %v745 = vadd.f32 %v709, %v744
      %v746 = vpop.f32.mrf.mxu0
      %v747 = vadd.f32 %v711, %v746
      %748 = vmatmul.bf16.gmra.mxu0 %v725
      %v749 = vpop.f32.mrf.mxu0
      %v750 = vadd.f32 %v714, %v749
      %v751 = vpop.f32.mrf.mxu0
      %v752 = vadd.f32 %v716, %v751
      %753 = vdwg.mxu0
      %s754 = scalar_lea.vmem %s5, 4
      %v755 = vld [vmem:[%s754] sm:$0x3]
      %v757 = vsel %vm683, %v665, 0
      %v760 = vsel %vm683, %v668, 0
      %v763 = vsel %vm683, %v679, 0
      %v766 = vsel %vm690, %v755, 0
      %768 = vmatpush.bf16.msra.mxu0 0
      %769 = vmatpush.bf16.msra.mxu0 0
      %770 = vmatpush.bf16.msra.mxu0 0
      %771 = vmatpush.bf16.msra.mxu0 0
      %772 = vmatpush.bf16.msra.mxu0 0
      %773 = vmatpush.bf16.msra.mxu0 0
      %774 = vmatpush.bf16.msra.mxu0 0
      %775 = vmatpush.bf16.msra.mxu0 %v766
      %776 = vmatmul.bf16.gmra.mxu0 %v757
      %v777 = vpop.f32.mrf.mxu0
      %v778 = vadd.f32 0.0, %v777
      %v779 = vpop.f32.mrf.mxu0
      %v780 = vadd.f32 0.0, %v779
      %781 = vmatmul.bf16.gmra.mxu0 %v760
      %v782 = vpop.f32.mrf.mxu0
      %v783 = vadd.f32 0.0, %v782
      %v784 = vpop.f32.mrf.mxu0
      %v785 = vadd.f32 0.0, %v784
      %786 = vmatmul.bf16.gmra.mxu0 %v763
      %v787 = vpop.f32.mrf.mxu0
      %v788 = vadd.f32 0.0, %v787
      %v789 = vpop.f32.mrf.mxu0
      %v790 = vadd.f32 0.0, %v789
      %791 = vdwg.mxu0
      %v792 = vadd.f32 %v740, %v778
      %v793 = vadd.f32 %v742, %v780
      %v794 = vadd.f32 %v745, %v783
      %v795 = vadd.f32 %v747, %v785
      %v796 = vadd.f32 %v750, %v788
      %v797 = vadd.f32 %v752, %v790
      %v798 = vld [vmem:[%s6] sm:$0x1]
      %v800 = vperm.slane %v798, 0
      %v802 = vadd.f32 %v792, %v800
      %v803 = vadd.f32 %v793, %v800
      %v804 = vadd.f32 %v794, %v800
      %v805 = vadd.f32 %v795, %v800
      %v806 = vadd.f32 %v796, %v800
      %v807 = vadd.f32 %v797, %v800
      %v808 = vpack.c.bf16 %v802, %v802
      %v809 = vpack.c.bf16 %v803, %v803
      %v810 = vpack.c.bf16 %v804, %v804
      %v811 = vpack.c.bf16 %v805, %v805
      %v812 = vpack.c.bf16 %v806, %v806
      %v813 = vpack.c.bf16 %v807, %v807
      %v814 = vsel %vm546, 1, 0
      %v815 = vsel %vm547, 1, 0
      %v816 = vsel %vm548, 1, 0
      %v817 = vsel %vm549, 1, 0
      %v818 = vsel %vm550, 1, 0
      %v819 = vsel %vm551, 1, 0
      %vm820 = vcmp.eq.s32.totalorder %v814, 1
      %vm821 = vcmp.eq.s32.totalorder %v815, 1
      %vm822 = vcmp.eq.s32.totalorder %v816, 1
      %vm823 = vcmp.eq.s32.totalorder %v817, 1
      %vm824 = vcmp.eq.s32.totalorder %v818, 1
      %vm825 = vcmp.eq.s32.totalorder %v819, 1
      %vm826 = vmpackc.low %vm820, %vm820
      %vm827 = vmpackc.low %vm821, %vm821
      %vm828 = vmpackc.low %vm822, %vm822
      %vm829 = vmpackc.low %vm823, %vm823
      %vm830 = vmpackc.low %vm824, %vm824
      %vm831 = vmpackc.low %vm825, %vm825
      %v832 = vsel %vm826, %v808, 0
      %v833 = vsel %vm827, %v809, 0
      %v834 = vsel %vm828, %v810, 0
      %v835 = vsel %vm829, %v811, 0
      %v836 = vsel %vm830, %v812, 0
      %v837 = vsel %vm831, %v813, 0
      %v838 = vunpack.c.l.bf16 %v832
      %v839 = vunpack.c.l.bf16 %v833
      %v840 = vunpack.c.l.bf16 %v834
      %v841 = vunpack.c.l.bf16 %v835
      %v842 = vunpack.c.l.bf16 %v836
      %v843 = vunpack.c.l.bf16 %v837
      %v844 = vmul.f32 %v838, 0.20019531
      %v845 = vmul.f32 %v839, 0.20019531
      %v846 = vmul.f32 %v840, 0.20019531
      %v847 = vmul.f32 %v841, 0.20019531
      %v848 = vmul.f32 %v842, 0.20019531
      %v849 = vmul.f32 %v843, 0.20019531
      %v850 = vpack.c.bf16 %v844, %v844
      %v851 = vpack.c.bf16 %v845, %v845
      %v852 = vpack.c.bf16 %v846, %v846
      %v853 = vpack.c.bf16 %v847, %v847
      %v854 = vpack.c.bf16 %v848, %v848
      %v855 = vpack.c.bf16 %v849, %v849
      %v856 = vunpack.c.l.bf16 %v850
      %v857 = vunpack.c.l.bf16 %v851
      %v858 = vunpack.c.l.bf16 %v852
      %v859 = vunpack.c.l.bf16 %v853
      %v860 = vunpack.c.l.bf16 %v854
      %v861 = vunpack.c.l.bf16 %v855
      %v862 = vmax.f32 %v838, %v856
      %v863 = vmax.f32 %v839, %v857
      %v864 = vmax.f32 %v840, %v858
      %v865 = vmax.f32 %v841, %v859
      %v866 = vmax.f32 %v842, %v860
      %v867 = vmax.f32 %v843, %v861
      %v868 = vpack.c.bf16 %v862, %v862
      %v869 = vpack.c.bf16 %v863, %v863
      %v870 = vpack.c.bf16 %v864, %v864
      %v871 = vpack.c.bf16 %v865, %v865
      %v872 = vpack.c.bf16 %v866, %v866
      %v873 = vpack.c.bf16 %v867, %v867
      %v875 = vunpack.c.l.b16 %v873
      %v876 = vpack.c.b16 %v875, %v875
      %v877 = vrot.slane %v876, 3
      %v883 = vunpack.c.l.b16 %v868
      %v884 = vunpack.c.l.b16 %v869
      %v885 = vunpack.c.l.b16 %v870
      %v886 = vunpack.c.l.b16 %v871
      %v887 = vunpack.c.l.b16 %v872
      %v888 = vpack.c.b16 %v884, %v883
      %v889 = vpack.c.b16 %v886, %v885
      %v890 = vpack.c.b16 %v875, %v887
      %v891 = vrot.slane %v888, 7
      %v892 = vrot.slane %v889, 7
      %v893 = vsel %vm658, %v891, %v892
      %v894 = vrot.slane %v890, 7
      %v895 = vsel %vm658, %v892, %v894
      %vm898 = vcmask 1040384
      %v901 = vsel %vm898, %v877, %v891
      %vm903 = vcmask 1046528
      %v904 = vrot.slane %v888, 1
      %v905 = vrot.slane %v889, 1
      %v906 = vsel %vm903, %v904, %v905
      %v907 = vrot.slane %v890, 1
      %v908 = vsel %vm903, %v905, %v907
      %v911 = vpack.c.b16 %v883, %v883
      %v912 = vrot.slane %v911, 1
      %vm913 = vcmask 1046528
      %v916 = vsel %vm913, %v907, %v912
      %v921 = vld [vmem:[%s7] sm:$0xf]
      %v922 = vld [vmem:[%s7 + $0x4] sm:$0xf]
      %v923 = vld [vmem:[%s7 + $0x8] sm:$0xf]
      %v924 = vld [vmem:[%s7 + $0xc] sm:$0xf]
      %v925 = vld [vmem:[%s7 + $0x10] sm:$0xf]
      %v926 = vld [vmem:[%s7 + $0x14] sm:$0xf]
      %v927 = vld [vmem:[%s7 + $0x18] sm:$0xf]
      %v928 = vld [vmem:[%s7 + $0x1c] sm:$0xf]
      %v929 = vld [vmem:[%s7 + $0x20] sm:$0xf]
      %v930 = vld [vmem:[%s7 + $0x24] sm:$0xf]
      %v931 = vld [vmem:[%s7 + $0x28] sm:$0xf]
      %v932 = vld [vmem:[%s7 + $0x2c] sm:$0xf]
      %v933 = vld [vmem:[%s7 + $0x30] sm:$0xf]
      %v934 = vld [vmem:[%s7 + $0x34] sm:$0xf]
      %v935 = vld [vmem:[%s7 + $0x38] sm:$0xf]
      %v936 = vld [vmem:[%s7 + $0x3c] sm:$0xf]
      %v937 = vld [vmem:[%s7 + $0x40] sm:$0xf]
      %v938 = vld [vmem:[%s7 + $0x44] sm:$0xf]
      %v939 = vld [vmem:[%s7 + $0x48] sm:$0xf]
      %v940 = vld [vmem:[%s7 + $0x4c] sm:$0xf]
      %v941 = vld [vmem:[%s7 + $0x50] sm:$0xf]
      %v942 = vld [vmem:[%s7 + $0x54] sm:$0xf]
      %v943 = vld [vmem:[%s7 + $0x58] sm:$0xf]
      %v944 = vld [vmem:[%s7 + $0x5c] sm:$0xf]
      %v945 = vld [vmem:[%s7 + $0x60] sm:$0xf]
      %v946 = vld [vmem:[%s7 + $0x64] sm:$0xf]
      %v947 = vld [vmem:[%s7 + $0x68] sm:$0xf]
      %v948 = vld [vmem:[%s7 + $0x6c] sm:$0xf]
      %v949 = vld [vmem:[%s7 + $0x70] sm:$0xf]
      %v950 = vld [vmem:[%s7 + $0x74] sm:$0xf]
      %v951 = vld [vmem:[%s7 + $0x78] sm:$0xf]
      %v952 = vld [vmem:[%s7 + $0x7c] sm:$0xf]
      %v953 = vld [vmem:[%s7 + $0x80] sm:$0xf]
      %v954 = vld [vmem:[%s7 + $0x84] sm:$0xf]
      %v955 = vld [vmem:[%s7 + $0x88] sm:$0xf]
      %v956 = vld [vmem:[%s7 + $0x8c] sm:$0xf]
      %v957 = vld [vmem:[%s7 + $0x90] sm:$0xf]
      %v958 = vld [vmem:[%s7 + $0x94] sm:$0xf]
      %v959 = vld [vmem:[%s7 + $0x98] sm:$0xf]
      %v960 = vld [vmem:[%s7 + $0x9c] sm:$0xf]
      %v961 = vld [vmem:[%s7 + $0xa0] sm:$0xf]
      %v962 = vld [vmem:[%s7 + $0xa4] sm:$0xf]
      %v963 = vld [vmem:[%s7 + $0xa8] sm:$0xf]
      %v964 = vld [vmem:[%s7 + $0xac] sm:$0xf]
      %v965 = vld [vmem:[%s7 + $0xb0] sm:$0xf]
      %v966 = vld [vmem:[%s7 + $0xb4] sm:$0xf]
      %v967 = vld [vmem:[%s7 + $0xb8] sm:$0xf]
      %v968 = vld [vmem:[%s7 + $0xbc] sm:$0xf]
      %v969 = vld [vmem:[%s8] sm:$0x1]
      %v971 = vperm.slane %v969, 0
      %v1021 = vunpack.c.l.b16 %v921
      %v1022 = vunpack.c.l.b16 %v922
      %v1023 = vunpack.c.l.b16 %v923
      %v1024 = vunpack.c.l.b16 %v924
      %v1025 = vunpack.c.l.b16 %v925
      %v1026 = vunpack.c.l.b16 %v926
      %v1027 = vunpack.c.l.b16 %v927
      %v1028 = vunpack.c.l.b16 %v928
      %v1029 = vunpack.c.l.b16 %v929
      %v1030 = vunpack.c.l.b16 %v930
      %v1031 = vunpack.c.l.b16 %v931
      %v1032 = vunpack.c.l.b16 %v932
      %v1033 = vunpack.c.l.b16 %v933
      %v1034 = vunpack.c.l.b16 %v934
      %v1035 = vunpack.c.l.b16 %v935
      %v1036 = vunpack.c.l.b16 %v936
      %v1037 = vunpack.c.l.b16 %v937
      %v1038 = vunpack.c.l.b16 %v938
      %v1039 = vunpack.c.l.b16 %v939
      %v1040 = vunpack.c.l.b16 %v940
      %v1041 = vunpack.c.l.b16 %v941
      %v1042 = vunpack.c.l.b16 %v942
      %v1043 = vunpack.c.l.b16 %v943
      %v1044 = vunpack.c.l.b16 %v944
      %v1045 = vunpack.c.l.b16 %v945
      %v1046 = vunpack.c.l.b16 %v946
      %v1047 = vunpack.c.l.b16 %v947
      %v1048 = vunpack.c.l.b16 %v948
      %v1049 = vunpack.c.l.b16 %v949
      %v1050 = vunpack.c.l.b16 %v950
      %v1051 = vunpack.c.l.b16 %v951
      %v1052 = vunpack.c.l.b16 %v952
      %v1053 = vunpack.c.l.b16 %v953
      %v1054 = vunpack.c.l.b16 %v954
      %v1055 = vunpack.c.l.b16 %v955
      %v1056 = vunpack.c.l.b16 %v956
      %v1057 = vunpack.c.l.b16 %v957
      %v1058 = vunpack.c.l.b16 %v958
      %v1059 = vunpack.c.l.b16 %v959
      %v1060 = vunpack.c.l.b16 %v960
      %v1061 = vunpack.c.l.b16 %v961
      %v1062 = vunpack.c.l.b16 %v962
      %v1063 = vunpack.c.l.b16 %v963
      %v1064 = vunpack.c.l.b16 %v964
      %v1065 = vunpack.c.l.b16 %v965
      %v1066 = vunpack.c.l.b16 %v966
      %v1067 = vunpack.c.l.b16 %v967
      %v1068 = vunpack.c.l.b16 %v968
      %v1069 = vpack.c.b16 %v1022, %v1021
      %v1070 = vpack.c.b16 %v1024, %v1023
      %v1071 = vpack.c.b16 %v1026, %v1025
      %v1072 = vpack.c.b16 %v1028, %v1027
      %v1073 = vpack.c.b16 %v1030, %v1029
      %v1074 = vpack.c.b16 %v1032, %v1031
      %v1075 = vpack.c.b16 %v1034, %v1033
      %v1076 = vpack.c.b16 %v1036, %v1035
      %v1077 = vpack.c.b16 %v1038, %v1037
      %v1078 = vpack.c.b16 %v1040, %v1039
      %v1079 = vpack.c.b16 %v1042, %v1041
      %v1080 = vpack.c.b16 %v1044, %v1043
      %v1081 = vpack.c.b16 %v1046, %v1045
      %v1082 = vpack.c.b16 %v1048, %v1047
      %v1083 = vpack.c.b16 %v1050, %v1049
      %v1084 = vpack.c.b16 %v1052, %v1051
      %v1085 = vpack.c.b16 %v1054, %v1053
      %v1086 = vpack.c.b16 %v1056, %v1055
      %v1087 = vpack.c.b16 %v1058, %v1057
      %v1088 = vpack.c.b16 %v1060, %v1059
      %v1089 = vpack.c.b16 %v1062, %v1061
      %v1090 = vpack.c.b16 %v1064, %v1063
      %v1091 = vpack.c.b16 %v1066, %v1065
      %v1092 = vpack.c.b16 %v1068, %v1067
      %1117 = vmatpush.bf16.msra.mxu0 %v1076
      %1118 = vmatpush.bf16.msra.mxu0 %v1075
      %1119 = vmatpush.bf16.msra.mxu0 %v1074
      %1120 = vmatpush.bf16.msra.mxu0 %v1073
      %1121 = vmatpush.bf16.msra.mxu0 %v1072
      %1122 = vmatpush.bf16.msra.mxu0 %v1071
      %1123 = vmatpush.bf16.msra.mxu0 %v1070
      %1124 = vmatpush.bf16.msra.mxu0 %v1069
      %1125 = vmatmul.bf16.gmra.mxu0 %v901
      %v1126 = vpop.f32.mrf.mxu0
      %v1127 = vadd.f32 %v971, %v1126
      %v1128 = vpop.f32.mrf.mxu0
      %v1129 = vadd.f32 %v971, %v1128
      %1130 = vmatmul.bf16.gmra.mxu0 %v893
      %v1131 = vpop.f32.mrf.mxu0
      %v1132 = vadd.f32 %v971, %v1131
      %v1133 = vpop.f32.mrf.mxu0
      %v1134 = vadd.f32 %v971, %v1133
      %1135 = vmatmul.bf16.gmra.mxu0 %v895
      %v1136 = vpop.f32.mrf.mxu0
      %v1137 = vadd.f32 %v971, %v1136
      %v1138 = vpop.f32.mrf.mxu0
      %v1139 = vadd.f32 %v971, %v1138
      %1140 = vdwg.mxu0
      %1141 = vmatpush.bf16.msra.mxu0 %v1084
      %1142 = vmatpush.bf16.msra.mxu0 %v1083
      %1143 = vmatpush.bf16.msra.mxu0 %v1082
      %1144 = vmatpush.bf16.msra.mxu0 %v1081
      %1145 = vmatpush.bf16.msra.mxu0 %v1080
      %1146 = vmatpush.bf16.msra.mxu0 %v1079
      %1147 = vmatpush.bf16.msra.mxu0 %v1078
      %1148 = vmatpush.bf16.msra.mxu0 %v1077
      %1149 = vmatmul.bf16.gmra.mxu0 %v888
      %v1150 = vpop.f32.mrf.mxu0
      %v1151 = vadd.f32 %v1127, %v1150
      %v1152 = vpop.f32.mrf.mxu0
      %v1153 = vadd.f32 %v1129, %v1152
      %1154 = vmatmul.bf16.gmra.mxu0 %v889
      %v1155 = vpop.f32.mrf.mxu0
      %v1156 = vadd.f32 %v1132, %v1155
      %v1157 = vpop.f32.mrf.mxu0
      %v1158 = vadd.f32 %v1134, %v1157
      %1159 = vmatmul.bf16.gmra.mxu0 %v890
      %v1160 = vpop.f32.mrf.mxu0
      %v1161 = vadd.f32 %v1137, %v1160
      %v1162 = vpop.f32.mrf.mxu0
      %v1163 = vadd.f32 %v1139, %v1162
      %1164 = vdwg.mxu0
      %1165 = vmatpush.bf16.msra.mxu0 %v1092
      %1166 = vmatpush.bf16.msra.mxu0 %v1091
      %1167 = vmatpush.bf16.msra.mxu0 %v1090
      %1168 = vmatpush.bf16.msra.mxu0 %v1089
      %1169 = vmatpush.bf16.msra.mxu0 %v1088
      %1170 = vmatpush.bf16.msra.mxu0 %v1087
      %1171 = vmatpush.bf16.msra.mxu0 %v1086
      %1172 = vmatpush.bf16.msra.mxu0 %v1085
      %1173 = vmatmul.bf16.gmra.mxu0 %v906
      %v1174 = vpop.f32.mrf.mxu0
      %v1175 = vadd.f32 %v1151, %v1174
      %v1176 = vpop.f32.mrf.mxu0
      %v1177 = vadd.f32 %v1153, %v1176
      %1178 = vmatmul.bf16.gmra.mxu0 %v908
      %v1179 = vpop.f32.mrf.mxu0
      %v1180 = vadd.f32 %v1156, %v1179
      %v1181 = vpop.f32.mrf.mxu0
      %v1182 = vadd.f32 %v1158, %v1181
      %1183 = vmatmul.bf16.gmra.mxu0 %v916
      %v1184 = vpop.f32.mrf.mxu0
      %v1185 = vadd.f32 %v1161, %v1184
      %v1186 = vpop.f32.mrf.mxu0
      %v1187 = vadd.f32 %v1163, %v1186
      %1188 = vdwg.mxu0
      %v1189 = vpack.c.bf16 %v1175, %v1175
      %v1190 = vpack.c.bf16 %v1177, %v1177
      %v1191 = vpack.c.bf16 %v1180, %v1180
      %v1192 = vpack.c.bf16 %v1182, %v1182
      %v1193 = vpack.c.bf16 %v1185, %v1185
      %v1194 = vpack.c.bf16 %v1187, %v1187
      %v1195 = vsel %vm826, %v1189, 0
      %v1196 = vsel %vm827, %v1190, 0
      %v1197 = vsel %vm828, %v1191, 0
      %v1198 = vsel %vm829, %v1192, 0
      %v1199 = vsel %vm830, %v1193, 0
      %v1200 = vsel %vm831, %v1194, 0
      %v1201 = vunpack.c.l.bf16 %v1195
      %v1202 = vunpack.c.l.bf16 %v1196
      %v1203 = vunpack.c.l.bf16 %v1197
      %v1204 = vunpack.c.l.bf16 %v1198
      %v1205 = vunpack.c.l.bf16 %v1199
      %v1206 = vunpack.c.l.bf16 %v1200
      %v1207 = vmul.f32 %v1201, 0.20019531
      %v1208 = vmul.f32 %v1202, 0.20019531
      %v1209 = vmul.f32 %v1203, 0.20019531
      %v1210 = vmul.f32 %v1204, 0.20019531
      %v1211 = vmul.f32 %v1205, 0.20019531
      %v1212 = vmul.f32 %v1206, 0.20019531
      %v1213 = vpack.c.bf16 %v1207, %v1207
      %v1214 = vpack.c.bf16 %v1208, %v1208
      %v1215 = vpack.c.bf16 %v1209, %v1209
      %v1216 = vpack.c.bf16 %v1210, %v1210
      %v1217 = vpack.c.bf16 %v1211, %v1211
      %v1218 = vpack.c.bf16 %v1212, %v1212
      %v1219 = vunpack.c.l.bf16 %v1213
      %v1220 = vunpack.c.l.bf16 %v1214
      %v1221 = vunpack.c.l.bf16 %v1215
      %v1222 = vunpack.c.l.bf16 %v1216
      %v1223 = vunpack.c.l.bf16 %v1217
      %v1224 = vunpack.c.l.bf16 %v1218
      %v1225 = vmax.f32 %v1201, %v1219
      %v1226 = vmax.f32 %v1202, %v1220
      %v1227 = vmax.f32 %v1203, %v1221
      %v1228 = vmax.f32 %v1204, %v1222
      %v1229 = vmax.f32 %v1205, %v1223
      %v1230 = vmax.f32 %v1206, %v1224
      %v1231 = vpack.c.bf16 %v1225, %v1225
      %v1232 = vpack.c.bf16 %v1226, %v1226
      %v1233 = vpack.c.bf16 %v1227, %v1227
      %v1234 = vpack.c.bf16 %v1228, %v1228
      %v1235 = vpack.c.bf16 %v1229, %v1229
      %v1236 = vpack.c.bf16 %v1230, %v1230
      %v1238 = vunpack.c.l.b16 %v1236
      %v1239 = vpack.c.b16 %v1238, %v1238
      %v1240 = vrot.slane %v1239, 2
      %v1246 = vunpack.c.l.b16 %v1231
      %v1247 = vunpack.c.l.b16 %v1232
      %v1248 = vunpack.c.l.b16 %v1233
      %v1249 = vunpack.c.l.b16 %v1234
      %v1250 = vunpack.c.l.b16 %v1235
      %v1251 = vpack.c.b16 %v1247, %v1246
      %v1252 = vpack.c.b16 %v1249, %v1248
      %v1253 = vpack.c.b16 %v1238, %v1250
      %vm1254 = vcmask 1041408
      %v1255 = vrot.slane %v1251, 6
      %v1256 = vrot.slane %v1252, 6
      %v1257 = vsel %vm1254, %v1255, %v1256
      %v1258 = vrot.slane %v1253, 6
      %v1259 = vsel %vm1254, %v1256, %v1258
      %v1264 = vsel %vm690, %v1240, %v1255
      %vm1266 = vcmask 1045504
      %v1267 = vrot.slane %v1251, 2
      %v1268 = vrot.slane %v1252, 2
      %v1269 = vsel %vm1266, %v1267, %v1268
      %v1270 = vrot.slane %v1253, 2
      %v1271 = vsel %vm1266, %v1268, %v1270
      %v1274 = vpack.c.b16 %v1246, %v1246
      %v1275 = vrot.slane %v1274, 2
      %vm1276 = vcmask 1045504
      %v1279 = vsel %vm1276, %v1270, %v1275
      %v1284 = vld [vmem:[%s9] sm:$0xf]
      %v1285 = vld [vmem:[%s9 + $0x4] sm:$0xf]
      %v1286 = vld [vmem:[%s9 + $0x8] sm:$0xf]
      %v1287 = vld [vmem:[%s9 + $0xc] sm:$0xf]
      %v1288 = vld [vmem:[%s9 + $0x10] sm:$0xf]
      %v1289 = vld [vmem:[%s9 + $0x14] sm:$0xf]
      %v1290 = vld [vmem:[%s9 + $0x18] sm:$0xf]
      %v1291 = vld [vmem:[%s9 + $0x1c] sm:$0xf]
      %v1292 = vld [vmem:[%s9 + $0x20] sm:$0xf]
      %v1293 = vld [vmem:[%s9 + $0x24] sm:$0xf]
      %v1294 = vld [vmem:[%s9 + $0x28] sm:$0xf]
      %v1295 = vld [vmem:[%s9 + $0x2c] sm:$0xf]
      %v1296 = vld [vmem:[%s9 + $0x30] sm:$0xf]
      %v1297 = vld [vmem:[%s9 + $0x34] sm:$0xf]
      %v1298 = vld [vmem:[%s9 + $0x38] sm:$0xf]
      %v1299 = vld [vmem:[%s9 + $0x3c] sm:$0xf]
      %v1300 = vld [vmem:[%s9 + $0x40] sm:$0xf]
      %v1301 = vld [vmem:[%s9 + $0x44] sm:$0xf]
      %v1302 = vld [vmem:[%s9 + $0x48] sm:$0xf]
      %v1303 = vld [vmem:[%s9 + $0x4c] sm:$0xf]
      %v1304 = vld [vmem:[%s9 + $0x50] sm:$0xf]
      %v1305 = vld [vmem:[%s9 + $0x54] sm:$0xf]
      %v1306 = vld [vmem:[%s9 + $0x58] sm:$0xf]
      %v1307 = vld [vmem:[%s9 + $0x5c] sm:$0xf]
      %v1308 = vld [vmem:[%s9 + $0x60] sm:$0xf]
      %v1309 = vld [vmem:[%s9 + $0x64] sm:$0xf]
      %v1310 = vld [vmem:[%s9 + $0x68] sm:$0xf]
      %v1311 = vld [vmem:[%s9 + $0x6c] sm:$0xf]
      %v1312 = vld [vmem:[%s9 + $0x70] sm:$0xf]
      %v1313 = vld [vmem:[%s9 + $0x74] sm:$0xf]
      %v1314 = vld [vmem:[%s9 + $0x78] sm:$0xf]
      %v1315 = vld [vmem:[%s9 + $0x7c] sm:$0xf]
      %v1316 = vld [vmem:[%s9 + $0x80] sm:$0xf]
      %v1317 = vld [vmem:[%s9 + $0x84] sm:$0xf]
      %v1318 = vld [vmem:[%s9 + $0x88] sm:$0xf]
      %v1319 = vld [vmem:[%s9 + $0x8c] sm:$0xf]
      %v1320 = vld [vmem:[%s9 + $0x90] sm:$0xf]
      %v1321 = vld [vmem:[%s9 + $0x94] sm:$0xf]
      %v1322 = vld [vmem:[%s9 + $0x98] sm:$0xf]
      %v1323 = vld [vmem:[%s9 + $0x9c] sm:$0xf]
      %v1324 = vld [vmem:[%s9 + $0xa0] sm:$0xf]
      %v1325 = vld [vmem:[%s9 + $0xa4] sm:$0xf]
      %v1326 = vld [vmem:[%s9 + $0xa8] sm:$0xf]
      %v1327 = vld [vmem:[%s9 + $0xac] sm:$0xf]
      %v1328 = vld [vmem:[%s9 + $0xb0] sm:$0xf]
      %v1329 = vld [vmem:[%s9 + $0xb4] sm:$0xf]
      %v1330 = vld [vmem:[%s9 + $0xb8] sm:$0xf]
      %v1331 = vld [vmem:[%s9 + $0xbc] sm:$0xf]
      %v1332 = vld [vmem:[%s10] sm:$0x1]
      %v1334 = vperm.slane %v1332, 0
      %v1384 = vunpack.c.l.b16 %v1284
      %v1385 = vunpack.c.l.b16 %v1285
      %v1386 = vunpack.c.l.b16 %v1286
      %v1387 = vunpack.c.l.b16 %v1287
      %v1388 = vunpack.c.l.b16 %v1288
      %v1389 = vunpack.c.l.b16 %v1289
      %v1390 = vunpack.c.l.b16 %v1290
      %v1391 = vunpack.c.l.b16 %v1291
      %v1392 = vunpack.c.l.b16 %v1292
      %v1393 = vunpack.c.l.b16 %v1293
      %v1394 = vunpack.c.l.b16 %v1294
      %v1395 = vunpack.c.l.b16 %v1295
      %v1396 = vunpack.c.l.b16 %v1296
      %v1397 = vunpack.c.l.b16 %v1297
      %v1398 = vunpack.c.l.b16 %v1298
      %v1399 = vunpack.c.l.b16 %v1299
      %v1400 = vunpack.c.l.b16 %v1300
      %v1401 = vunpack.c.l.b16 %v1301
      %v1402 = vunpack.c.l.b16 %v1302
      %v1403 = vunpack.c.l.b16 %v1303
      %v1404 = vunpack.c.l.b16 %v1304
      %v1405 = vunpack.c.l.b16 %v1305
      %v1406 = vunpack.c.l.b16 %v1306
      %v1407 = vunpack.c.l.b16 %v1307
      %v1408 = vunpack.c.l.b16 %v1308
      %v1409 = vunpack.c.l.b16 %v1309
      %v1410 = vunpack.c.l.b16 %v1310
      %v1411 = vunpack.c.l.b16 %v1311
      %v1412 = vunpack.c.l.b16 %v1312
      %v1413 = vunpack.c.l.b16 %v1313
      %v1414 = vunpack.c.l.b16 %v1314
      %v1415 = vunpack.c.l.b16 %v1315
      %v1416 = vunpack.c.l.b16 %v1316
      %v1417 = vunpack.c.l.b16 %v1317
      %v1418 = vunpack.c.l.b16 %v1318
      %v1419 = vunpack.c.l.b16 %v1319
      %v1420 = vunpack.c.l.b16 %v1320
      %v1421 = vunpack.c.l.b16 %v1321
      %v1422 = vunpack.c.l.b16 %v1322
      %v1423 = vunpack.c.l.b16 %v1323
      %v1424 = vunpack.c.l.b16 %v1324
      %v1425 = vunpack.c.l.b16 %v1325
      %v1426 = vunpack.c.l.b16 %v1326
      %v1427 = vunpack.c.l.b16 %v1327
      %v1428 = vunpack.c.l.b16 %v1328
      %v1429 = vunpack.c.l.b16 %v1329
      %v1430 = vunpack.c.l.b16 %v1330
      %v1431 = vunpack.c.l.b16 %v1331
      %v1432 = vpack.c.b16 %v1385, %v1384
      %v1433 = vpack.c.b16 %v1387, %v1386
      %v1434 = vpack.c.b16 %v1389, %v1388
      %v1435 = vpack.c.b16 %v1391, %v1390
      %v1436 = vpack.c.b16 %v1393, %v1392
      %v1437 = vpack.c.b16 %v1395, %v1394
      %v1438 = vpack.c.b16 %v1397, %v1396
      %v1439 = vpack.c.b16 %v1399, %v1398
      %v1440 = vpack.c.b16 %v1401, %v1400
      %v1441 = vpack.c.b16 %v1403, %v1402
      %v1442 = vpack.c.b16 %v1405, %v1404
      %v1443 = vpack.c.b16 %v1407, %v1406
      %v1444 = vpack.c.b16 %v1409, %v1408
      %v1445 = vpack.c.b16 %v1411, %v1410
      %v1446 = vpack.c.b16 %v1413, %v1412
      %v1447 = vpack.c.b16 %v1415, %v1414
      %v1448 = vpack.c.b16 %v1417, %v1416
      %v1449 = vpack.c.b16 %v1419, %v1418
      %v1450 = vpack.c.b16 %v1421, %v1420
      %v1451 = vpack.c.b16 %v1423, %v1422
      %v1452 = vpack.c.b16 %v1425, %v1424
      %v1453 = vpack.c.b16 %v1427, %v1426
      %v1454 = vpack.c.b16 %v1429, %v1428
      %v1455 = vpack.c.b16 %v1431, %v1430
      %1480 = vmatpush.bf16.msra.mxu0 %v1439
      %1481 = vmatpush.bf16.msra.mxu0 %v1438
      %1482 = vmatpush.bf16.msra.mxu0 %v1437
      %1483 = vmatpush.bf16.msra.mxu0 %v1436
      %1484 = vmatpush.bf16.msra.mxu0 %v1435
      %1485 = vmatpush.bf16.msra.mxu0 %v1434
      %1486 = vmatpush.bf16.msra.mxu0 %v1433
      %1487 = vmatpush.bf16.msra.mxu0 %v1432
      %1488 = vmatmul.bf16.gmra.mxu0 %v1264
      %v1489 = vpop.f32.mrf.mxu0
      %v1490 = vpop.f32.mrf.mxu0
      %1491 = vmatmul.bf16.gmra.mxu0 %v1257
      %v1492 = vpop.f32.mrf.mxu0
      %v1493 = vadd.f32 %v1334, %v1492
      %v1494 = vpop.f32.mrf.mxu0
      %v1495 = vadd.f32 %v1334, %v1494
      %1496 = vmatmul.bf16.gmra.mxu0 %v1259
      %v1497 = vpop.f32.mrf.mxu0
      %v1498 = vpop.f32.mrf.mxu0
      %1499 = vdwg.mxu0
      %1500 = vmatpush.bf16.msra.mxu0 %v1447
      %1501 = vmatpush.bf16.msra.mxu0 %v1446
      %1502 = vmatpush.bf16.msra.mxu0 %v1445
      %1503 = vmatpush.bf16.msra.mxu0 %v1444
      %1504 = vmatpush.bf16.msra.mxu0 %v1443
      %1505 = vmatpush.bf16.msra.mxu0 %v1442
      %1506 = vmatpush.bf16.msra.mxu0 %v1441
      %1507 = vmatpush.bf16.msra.mxu0 %v1440
      %1508 = vmatmul.bf16.gmra.mxu0 %v1251
      %v1509 = vpop.f32.mrf.mxu0
      %v1510 = vpop.f32.mrf.mxu0
      %1511 = vmatmul.bf16.gmra.mxu0 %v1252
      %v1512 = vpop.f32.mrf.mxu0
      %v1513 = vadd.f32 %v1493, %v1512
      %v1514 = vpop.f32.mrf.mxu0
      %v1515 = vadd.f32 %v1495, %v1514
      %1516 = vmatmul.bf16.gmra.mxu0 %v1253
      %v1517 = vpop.f32.mrf.mxu0
      %v1518 = vpop.f32.mrf.mxu0
      %1519 = vdwg.mxu0
      %1520 = vmatpush.bf16.msra.mxu0 %v1455
      %1521 = vmatpush.bf16.msra.mxu0 %v1454
      %1522 = vmatpush.bf16.msra.mxu0 %v1453
      %1523 = vmatpush.bf16.msra.mxu0 %v1452
      %1524 = vmatpush.bf16.msra.mxu0 %v1451
      %1525 = vmatpush.bf16.msra.mxu0 %v1450
      %1526 = vmatpush.bf16.msra.mxu0 %v1449
      %1527 = vmatpush.bf16.msra.mxu0 %v1448
      %1528 = vmatmul.bf16.gmra.mxu0 %v1269
      %v1529 = vpop.f32.mrf.mxu0
      %v1530 = vpop.f32.mrf.mxu0
      %1531 = vmatmul.bf16.gmra.mxu0 %v1271
      %v1532 = vpop.f32.mrf.mxu0
      %v1533 = vadd.f32 %v1513, %v1532
      %v1534 = vpop.f32.mrf.mxu0
      %v1535 = vadd.f32 %v1515, %v1534
      %1536 = vmatmul.bf16.gmra.mxu0 %v1279
      %v1537 = vpop.f32.mrf.mxu0
      %v1538 = vpop.f32.mrf.mxu0
      %1539 = vdwg.mxu0
      %v1540 = vld [vmem:[%s3] sm:$0x3]
      %v1541 = vld [vmem:[%s4] sm:$0x1]
      %v1543 = vperm.slane %v1541, 0
      %v1546 = vsel %vm683, %v568, 0
      %v1549 = vsel %vm690, %v1540, 0
      %1551 = vmatpush.bf16.msra.mxu0 0
      %1552 = vmatpush.bf16.msra.mxu0 0
      %1553 = vmatpush.bf16.msra.mxu0 0
      %1554 = vmatpush.bf16.msra.mxu0 0
      %1555 = vmatpush.bf16.msra.mxu0 0
      %1556 = vmatpush.bf16.msra.mxu0 0
      %1557 = vmatpush.bf16.msra.mxu0 0
      %1558 = vmatpush.bf16.msra.mxu0 %v1549
      %1559 = vmatmul.bf16.gmra.mxu0 %v1546
      %v1560 = vpop.f32.mrf.mxu0
      %v1561 = vadd.f32 %v1543, %v1560
      %v1562 = vpop.f32.mrf.mxu0
      %v1563 = vadd.f32 %v1543, %v1562
      %1564 = vdwg.mxu0
      %v1565 = vadd.f32 %v1533, %v1561
      %v1566 = vadd.f32 %v1535, %v1563
      %v1567 = vpack.c.bf16 %v1565, %v1565
      %v1568 = vpack.c.bf16 %v1566, %v1566
      %1569 = vst [vmem:[%s510] sm:$0xf] %v1567
      %1570 = vst [vmem:[%s510 + $0x4] sm:$0xf] %v1568
      %s1571 = smul.u32 2, %s27
      %p1572 = scmp.lt.s32.totalorder %s26, 1
      %s1573 = scalar_select %p1572, %s26, 1
      %p1574 = scmp.lt.s32.totalorder %s1571, 1
      %s1575 = scalar_select %p1574, %s1571, 1
      %s1576 = smul.addr %s1573, 2
      %s1577 = sadd.s32 %s1575, %s1576
      %s1578 = smul.addr %s1577, 4
      %s1579 = scalar_lea.vmem %s11, %s1578
      // Predicated region
      $region65: #{dblock_forward.1} parent=63 // pred_check
        %p1580 = pneg %p310
      $region66: #{dblock_forward.1} parent=63 // pred_check_branch
        %1582 = sbr.rel (%p1580) target = $region68
      $region67: #{dblock_forward.1} parent=63 // pred_region
        %s1583 = smul.u32 2, %s27
      $region68: #{dblock_forward.1} parent=63 // pred_fallthru
        _
    $region64: #{dblock_forward.1} parent=5 // pred_fallthru
      _
    %p1584 = scmp.le.s32.totalorder 2, %s17
    // Predicated region
    $region69: #{dblock_forward.1} parent=5 // pred_check
      %p1585 = pneg %p1584
    $region70: #{dblock_forward.1} parent=5 // pred_check_branch
      %1587 = sbr.rel (%p1585) target = $region72
    $region71: #{dblock_forward.1} parent=5 // pred_region
      %s1588 = ssub.s32 %s17, 2
      // Predicated region
      $region73: #{dblock_forward.1} parent=71 // pred_check
        %p1589 = pneg %p316
      $region74: #{dblock_forward.1} parent=71 // pred_check_branch
        %1591 = sbr.rel (%p1589) target = $region76
      $region75: #{dblock_forward.1} parent=71 // pred_region
        %s1592 = smul.u32 2, %s29
        %p1593 = scmp.lt.s32.totalorder %s28, 1
        %s1594 = scalar_select %p1593, %s28, 1
        %p1595 = scmp.lt.s32.totalorder %s1592, 1
        %s1596 = scalar_select %p1595, %s1592, 1
        %s1597 = smul.addr %s1594, 2
        %s1598 = sadd.s32 %s1596, %s1597
        %s1599 = smul.addr %s1598, 4
        %s1600 = scalar_lea.vmem %s11, %s1599
      $region76: #{dblock_forward.1} parent=71 // pred_fallthru
        _
    $region72: #{dblock_forward.1} parent=5 // pred_fallthru
      _
  $region6: #{dblock_forward.1} parent=0 // loop_footer
    %s21 = sadd.s32 1, %s17
  $region7: #{dblock_forward.1} parent=0 // loop_footer_branch
    %16 = sbr.rel target = $region3
  $region8: #{dblock_forward.1} parent=0 // loop_exit
    _

</llo_original>
